<compile_context>
chip_gen: v5e
topology: v5e:2x2
jax: 0.10.0
libtpu: 0.0.40
codegen_flags: <defaults>
</compile_context>

<pallas_src>
import functools

import jax
import jax.numpy as jnp
from jax import lax
from jax.experimental import pallas as pl
from jax.experimental.pallas import tpu as pltpu


def _pick_chunk(T, max_chunk=16):
    """Largest Tc <= max_chunk dividing T (avoids any wrapper-side padding)."""
    for c in (max_chunk, 16, 8, 4, 2, 1):
        if 0 < c <= T and T % c == 0:
            return c
    return 1


# --------------------------------------------------------------------------
# Fused kernel: per grid step, project a chunk of Tc timesteps through the
# non-recurrent weights with one MXU pass per operand, then run the serial
# recurrence over the chunk with h/c carried in VMEM scratch.
# --------------------------------------------------------------------------
def _fused_lstm_kernel(x_ref, z_ref, m_ref, wx_ref, wz_ref, wm_ref, b_ref,
                       uh_ref, h0_ref, c0_ref,
                       h_out_ref, c_out_ref, h_state, c_state,
                       *, Tc, B, H):
    @pl.when(pl.program_id(0) == 0)
    def _():
        h_state[...] = h0_ref[...].astype(jnp.float32)
        c_state[...] = c0_ref[...].astype(jnp.float32)

    w_dtype = wx_ref.dtype

    # Non-recurrent projection for ALL Tc timesteps of the chunk at once:
    #   (Tc*B, Dx) @ (Dx, 4H) + (Tc*B, Dz) @ (Dz, 4H) + m * w_m + b
    gin = (
        jnp.dot(x_ref[...].astype(w_dtype), wx_ref[...],
                preferred_element_type=jnp.float32)
        + jnp.dot(z_ref[...].astype(w_dtype), wz_ref[...],
                  preferred_element_type=jnp.float32)
        + m_ref[...].astype(jnp.float32) * wm_ref[...].astype(jnp.float32)
        + b_ref[...].astype(jnp.float32)
    )  # (Tc*B, 4H) f32

    # Hoisted lane mask: lanes [2H, 3H) are the tanh (c_hat) gate.
    lane = lax.broadcasted_iota(jnp.int32, (B, 4 * H), 1)
    chat_mask = (lane >= 2 * H) & (lane < 3 * H)

    # Serial recurrence over the chunk.  Static Python loop == fully unrolled
    # with constant offsets (state lives in refs, so no growing live ranges).
    for tt in range(Tc):
        g = gin[tt * B:(tt + 1) * B, :]                       # (B, 4H)
        gates = g + jnp.dot(h_state[...].astype(w_dtype), uh_ref[...],
                            preferred_element_type=jnp.float32)

        # Two full-vreg EUP activations + lane-mask select instead of four
        # sub-vreg transcendental calls ([B,4H] = one (8,128) vreg at H=32).
        act = jnp.where(chat_mask, jnp.tanh(gates), jax.nn.sigmoid(gates))
        f_t = act[:, 0 * H:1 * H]
        i_t = act[:, 1 * H:2 * H]
        c_hat = act[:, 2 * H:3 * H]
        o_t = act[:, 3 * H:4 * H]

        c_t = f_t * c_state[...] + i_t * c_hat
        h_t = o_t * jnp.tanh(c_t)
        # TODO(synk): nn.Dropout(0.2) on h_t is identity in eval mode;
        # training-mode dropout needs pltpu.prng_seed / prng_random_bits.

        h_state[...] = h_t
        c_state[...] = c_t
        h_out_ref[tt * B:(tt + 1) * B, :] = h_t.astype(h_out_ref.dtype)
        c_out_ref[tt * B:(tt + 1) * B, :] = c_t.astype(c_out_ref.dtype)


# --------------------------------------------------------------------------
# One-time parameter fusion (do this at init / outside the hot path).
# --------------------------------------------------------------------------
def fuse_params(params, dtype=jnp.float32):
    """Fuse per-gate weights. dtype=jnp.bfloat16 halves weight DMA on v6e/v7x
    (accumulation stays f32 in-kernel); default f32 keeps tight tolerances."""
    gates = ("f", "i", "c", "o")
    # Per-operand fused weights, columns = [f | i | c | o].
    w_x = jnp.concatenate([params[f"W_{g}_w"].T for g in gates], axis=1)  # [Dx,4H]
    w_z = jnp.concatenate([params[f"V_{g}_w"].T for g in gates], axis=1)  # [Dz,4H]
    w_m = jnp.concatenate([params[f"M_{g}_w"].T for g in gates], axis=1)  # [1, 4H]
    u_h = jnp.concatenate([params[f"U_{g}_w"].T for g in gates], axis=1)  # [H, 4H]
    # Only the W_* Linears carry a bias in the PyTorch module (U/V/M bias=False);
    # fold it together with the free b_* parameter.
    b = jnp.concatenate(
        [params[f"W_{g}_b"] + params[f"b_{g}"] for g in gates], axis=0
    ).reshape(1, -1)                                                      # [1, 4H]
    H = params["U_f_w"].shape[0]
    assert u_h.shape == (H, 4 * H)
    return {"w_x": w_x.astype(dtype), "w_z": w_z.astype(dtype),
            "w_m": w_m.astype(dtype), "u_h": u_h.astype(dtype),
            "b": b.astype(jnp.float32)}


# --------------------------------------------------------------------------
# Sequence-fused forward: ONE pallas_call applies the cell over T timesteps.
# --------------------------------------------------------------------------
@functools.partial(jax.jit, static_argnames=("max_chunk",))
def adaptive_lstm_sequence(x_seq, z_seq, m_seq, h0, c0, fused, *, max_chunk=16):
    T, B, Dx = x_seq.shape
    Dz = z_seq.shape[-1]
    w_x, w_z, w_m = fused["w_x"], fused["w_z"], fused["w_m"]
    u_h, b = fused["u_h"], fused["b"]
    H = u_h.shape[0]
    out_dtype = x_seq.dtype

    Tc = _pick_chunk(T, max_chunk)
    rows = Tc * B                       # rows per chunk (multiple of 8 for B=8)

    # Contiguous flattens only (layout-free in XLA) — no concat / pad passes.
    x2 = x_seq.reshape(T * B, Dx)
    z2 = z_seq.reshape(T * B, Dz)
    m2 = m_seq.reshape(T * B, 1)

    kernel = functools.partial(_fused_lstm_kernel, Tc=Tc, B=B, H=H)

    h_flat, c_flat = pl.pallas_call(
        kernel,
        out_shape=(jax.ShapeDtypeStruct((T * B, H), out_dtype),
                   jax.ShapeDtypeStruct((T * B, H), out_dtype)),
        grid_spec=pltpu.PrefetchScalarGridSpec(
            num_scalar_prefetch=0,
            grid=(T // Tc,),
            in_specs=[
                # Per-chunk streamed inputs (auto double-buffered by Pallas).
                pl.BlockSpec((rows, Dx), lambda t: (t, 0)),
                pl.BlockSpec((rows, Dz), lambda t: (t, 0)),
                pl.BlockSpec((rows, 1), lambda t: (t, 0)),
                # Constant index_maps -> fetched once, VMEM-resident.
                pl.BlockSpec((Dx, 4 * H), lambda t: (0, 0)),
                pl.BlockSpec((Dz, 4 * H), lambda t: (0, 0)),
                pl.BlockSpec((1, 4 * H), lambda t: (0, 0)),
                pl.BlockSpec((1, 4 * H), lambda t: (0, 0)),
                pl.BlockSpec((H, 4 * H), lambda t: (0, 0)),
                pl.BlockSpec((B, H), lambda t: (0, 0)),
                pl.BlockSpec((B, H), lambda t: (0, 0)),
            ],
            out_specs=(pl.BlockSpec((rows, H), lambda t: (t, 0)),
                       pl.BlockSpec((rows, H), lambda t: (t, 0))),
            scratch_shapes=[pltpu.VMEM((B, H), jnp.float32),   # h carry
                            pltpu.VMEM((B, H), jnp.float32)],  # c carry
        ),
        compiler_params=pltpu.CompilerParams(
            dimension_semantics=("arbitrary",)),   # recurrence is serial
    )(x2, z2, m2, w_x, w_z, w_m, b, u_h, h0, c0)

    return h_flat.reshape(T, B, H), c_flat.reshape(T, B, H)


def adaptive_lstm_cell(x_t, h_prev, c_prev, z_t, mass_discrepancy, fused):
    """Single-step forward matching the PyTorch module's forward() (eval).
    T=1 routes through the same single fused pallas_call (one launch)."""
    h_seq, c_seq = adaptive_lstm_sequence(
        x_t[None], z_t[None], mass_discrepancy[None], h_prev, c_prev, fused)
    return h_seq[0], c_seq[0]


# --------------------------------------------------------------------------
# Parameter init + pure-JAX reference of the PyTorch forward (for checking).
# --------------------------------------------------------------------------
def init_params(key, input_dim, hidden_dim, additional_dim, dtype=jnp.float32):
    params = {}
    keys = jax.random.split(key, 24)
    k = iter(keys)
    for g in ("f", "i", "c", "o"):
        params[f"W_{g}_w"] = 0.1 * jax.random.normal(next(k), (hidden_dim, input_dim), dtype)
        params[f"W_{g}_b"] = 0.1 * jax.random.normal(next(k), (hidden_dim,), dtype)
        params[f"U_{g}_w"] = 0.1 * jax.random.normal(next(k), (hidden_dim, hidden_dim), dtype)
        params[f"V_{g}_w"] = 0.1 * jax.random.normal(next(k), (hidden_dim, additional_dim), dtype)
        params[f"M_{g}_w"] = 0.1 * jax.random.normal(next(k), (hidden_dim, 1), dtype)
        params[f"b_{g}"] = jnp.zeros((hidden_dim,), dtype)
    return params


def reference_forward(x_t, h_prev, c_prev, z_t, m, p):
    def lin(w, x, b=None):
        y = x @ w.T
        return y + b if b is not None else y

    def gate(g, act):
        pre = (lin(p[f"W_{g}_w"], x_t, p[f"W_{g}_b"]) + lin(p[f"U_{g}_w"], h_prev)
               + lin(p[f"V_{g}_w"], z_t) + lin(p[f"M_{g}_w"], m) + p[f"b_{g}"])
        return act(pre)

    f_t = gate("f", jax.nn.sigmoid)
    i_t = gate("i", jax.nn.sigmoid)
    c_hat = gate("c", jnp.tanh)
    c_t = f_t * c_prev + i_t * c_hat
    o_t = gate("o", jax.nn.sigmoid)
    h_t = o_t * jnp.tanh(c_t)   # dropout is identity in eval mode
    return h_t, c_t


def reference_sequence(x_seq, z_seq, m_seq, h0, c0, params):
    h, c = h0, c0
    hs, cs = [], []
    for t in range(x_seq.shape[0]):
        h, c = reference_forward(x_seq[t], h, c, z_seq[t], m_seq[t], params)
        hs.append(h)
        cs.append(c)
    return jnp.stack(hs), jnp.stack(cs)


if __name__ == "__main__":
    T, B, INPUT_DIM, HIDDEN_DIM, ADDITIONAL_DIM = 16, 8, 16, 32, 8

    key = jax.random.PRNGKey(0)
    kp, kx, kh, kc, kz, km = jax.random.split(key, 6)

    params = init_params(kp, INPUT_DIM, HIDDEN_DIM, ADDITIONAL_DIM)
    fused = fuse_params(params)          # one-time fusion, outside hot path

    x_seq = jax.random.normal(kx, (T, B, INPUT_DIM), jnp.float32)
    z_seq = jax.random.normal(kz, (T, B, ADDITIONAL_DIM), jnp.float32)
    m_seq = jax.random.normal(km, (T, B, 1), jnp.float32)
    h0 = jax.random.normal(kh, (B, HIDDEN_DIM), jnp.float32)
    c0 = jax.random.normal(kc, (B, HIDDEN_DIM), jnp.float32)

    # Sequence-fused path: one pallas_call covers projection + recurrence.
    h_seq, c_seq = adaptive_lstm_sequence(x_seq, z_seq, m_seq, h0, c0, fused)
    jax.block_until_ready((h_seq, c_seq))

    h_ref, c_ref = reference_sequence(x_seq, z_seq, m_seq, h0, c0, params)
    assert jnp.allclose(h_seq, h_ref, atol=1e-4, rtol=1e-4), "h_seq mismatch"
    assert jnp.allclose(c_seq, c_ref, atol=1e-4, rtol=1e-4), "c_seq mismatch"

    # Single-step API (exact module forward signature), one kernel launch.
    h1, c1 = adaptive_lstm_cell(x_seq[0], h0, c0, z_seq[0], m_seq[0], fused)
    jax.block_until_ready((h1, c1))
    h1_ref, c1_ref = reference_forward(x_seq[0], h0, c0, z_seq[0], m_seq[0], params)
    assert jnp.allclose(h1, h1_ref, atol=1e-4, rtol=1e-4), "h_t mismatch"
    assert jnp.allclose(c1, c1_ref, atol=1e-4, rtol=1e-4), "c_t mismatch"

    print("KERNEL_OK")
</pallas_src>

<mosaic_0001>
module attributes {stable_mosaic.version = 11 : i64} {
  func.func @_fused_lstm_kernel(%arg0: i32, %arg1: memref<128x16xf32, #tpu.memory_space<vmem>>, %arg2: memref<128x8xf32, #tpu.memory_space<vmem>>, %arg3: memref<128x1xf32, #tpu.memory_space<vmem>>, %arg4: memref<16x128xf32, #tpu.memory_space<vmem>>, %arg5: memref<8x128xf32, #tpu.memory_space<vmem>>, %arg6: memref<1x128xf32, #tpu.memory_space<vmem>>, %arg7: memref<1x128xf32, #tpu.memory_space<vmem>>, %arg8: memref<32x128xf32, #tpu.memory_space<vmem>>, %arg9: memref<8x32xf32, #tpu.memory_space<vmem>>, %arg10: memref<8x32xf32, #tpu.memory_space<vmem>>, %arg11: memref<128x32xf32, #tpu.memory_space<vmem>>, %arg12: memref<128x32xf32, #tpu.memory_space<vmem>>, %arg13: memref<8x32xf32, #tpu.memory_space<vmem>>, %arg14: memref<8x32xf32, #tpu.memory_space<vmem>>) attributes {dimension_semantics = [#tpu.dimension_semantics<arbitrary>], iteration_bounds = array<i64: 1>, scalar_prefetch = 0 : i64, scratch_operands = 2 : i64, tpu.core_type = #tpu.core_type<tc>, window_params = [{transform_indices = @transform_0, window_bounds = array<i64: 128, 16>}, {transform_indices = @transform_1, window_bounds = array<i64: 128, 8>}, {transform_indices = @transform_2, window_bounds = array<i64: 128, 1>}, {pipeline_mode = #tpu.pipeline_mode<synchronous>, transform_indices = @transform_3, window_bounds = array<i64: 16, 128>}, {pipeline_mode = #tpu.pipeline_mode<synchronous>, transform_indices = @transform_4, window_bounds = array<i64: 8, 128>}, {pipeline_mode = #tpu.pipeline_mode<synchronous>, transform_indices = @transform_5, window_bounds = array<i64: 1, 128>}, {pipeline_mode = #tpu.pipeline_mode<synchronous>, transform_indices = @transform_6, window_bounds = array<i64: 1, 128>}, {pipeline_mode = #tpu.pipeline_mode<synchronous>, transform_indices = @transform_7, window_bounds = array<i64: 32, 128>}, {pipeline_mode = #tpu.pipeline_mode<synchronous>, transform_indices = @transform_8, window_bounds = array<i64: 8, 32>}, {pipeline_mode = #tpu.pipeline_mode<synchronous>, transform_indices = @transform_9, window_bounds = array<i64: 8, 32>}, {transform_indices = @transform_10, window_bounds = array<i64: 128, 32>}, {transform_indices = @transform_11, window_bounds = array<i64: 128, 32>}]} {
    %c0_i32 = arith.constant 0 : i32
    %0 = arith.cmpi eq, %arg0, %c0_i32 : i32
    %1 = arith.extui %0 : i1 to i32
    %c0_i32_0 = arith.constant 0 : i32
    %2 = arith.cmpi ne, %1, %c0_i32_0 : i32
    scf.if %2 {
      %c0_256 = arith.constant 0 : index
      %c0_257 = arith.constant 0 : index
      %441 = vector.load %arg9[%c0_256, %c0_257] : memref<8x32xf32, #tpu.memory_space<vmem>>, vector<8x32xf32>
      %c0_258 = arith.constant 0 : index
      %c0_259 = arith.constant 0 : index
      %442 = vector.load %arg13[%c0_258, %c0_259] : memref<8x32xf32, #tpu.memory_space<vmem>>, vector<8x32xf32>
      tpu.vector_store %arg13[%c0_258, %c0_259], %441 {strides = array<i32>} : memref<8x32xf32, #tpu.memory_space<vmem>>, vector<8x32xf32>,
      %c0_260 = arith.constant 0 : index
      %c0_261 = arith.constant 0 : index
      %443 = vector.load %arg10[%c0_260, %c0_261] : memref<8x32xf32, #tpu.memory_space<vmem>>, vector<8x32xf32>
      %c0_262 = arith.constant 0 : index
      %c0_263 = arith.constant 0 : index
      %444 = vector.load %arg14[%c0_262, %c0_263] : memref<8x32xf32, #tpu.memory_space<vmem>>, vector<8x32xf32>
      tpu.vector_store %arg14[%c0_262, %c0_263], %443 {strides = array<i32>} : memref<8x32xf32, #tpu.memory_space<vmem>>, vector<8x32xf32>,
    } else {
    }
    %c0 = arith.constant 0 : index
    %c0_1 = arith.constant 0 : index
    %3 = vector.load %arg1[%c0, %c0_1] : memref<128x16xf32, #tpu.memory_space<vmem>>, vector<128x16xf32>
    %c0_2 = arith.constant 0 : index
    %c0_3 = arith.constant 0 : index
    %4 = vector.load %arg4[%c0_2, %c0_3] : memref<16x128xf32, #tpu.memory_space<vmem>>, vector<16x128xf32>
    %cst = arith.constant dense<0.000000e+00> : vector<128x128xf32>
    %5 = tpu.matmul %3, %4, %cst {dimension_numbers = #tpu.dot_dimension_numbers<[1], [0], [0], [1], [0, 0, 1, 1], [], []>} : vector<128x16xf32>, vector<16x128xf32>, vector<128x128xf32> -> vector<128x128xf32>
    %c0_4 = arith.constant 0 : index
    %c0_5 = arith.constant 0 : index
    %6 = vector.load %arg2[%c0_4, %c0_5] : memref<128x8xf32, #tpu.memory_space<vmem>>, vector<128x8xf32>
    %c0_6 = arith.constant 0 : index
    %c0_7 = arith.constant 0 : index
    %7 = vector.load %arg5[%c0_6, %c0_7] : memref<8x128xf32, #tpu.memory_space<vmem>>, vector<8x128xf32>
    %cst_8 = arith.constant dense<0.000000e+00> : vector<128x128xf32>
    %8 = tpu.matmul %6, %7, %cst_8 {dimension_numbers = #tpu.dot_dimension_numbers<[1], [0], [0], [1], [0, 0, 1, 1], [], []>} : vector<128x8xf32>, vector<8x128xf32>, vector<128x128xf32> -> vector<128x128xf32>
    %9 = arith.addf %5, %8 : vector<128x128xf32>
    %c0_9 = arith.constant 0 : index
    %c0_10 = arith.constant 0 : index
    %10 = vector.load %arg3[%c0_9, %c0_10] : memref<128x1xf32, #tpu.memory_space<vmem>>, vector<128x1xf32>
    %c0_11 = arith.constant 0 : index
    %c0_12 = arith.constant 0 : index
    %11 = vector.load %arg6[%c0_11, %c0_12] : memref<1x128xf32, #tpu.memory_space<vmem>>, vector<1x128xf32>
    %12 = vector.broadcast %10 : vector<128x1xf32> to vector<128x128xf32>
    %13 = vector.broadcast %11 : vector<1x128xf32> to vector<128x128xf32>
    %14 = arith.mulf %12, %13 : vector<128x128xf32>
    %15 = arith.addf %9, %14 : vector<128x128xf32>
    %c0_13 = arith.constant 0 : index
    %c0_14 = arith.constant 0 : index
    %16 = vector.load %arg7[%c0_13, %c0_14] : memref<1x128xf32, #tpu.memory_space<vmem>>, vector<1x128xf32>
    %17 = vector.broadcast %16 : vector<1x128xf32> to vector<128x128xf32>
    %18 = arith.addf %15, %17 : vector<128x128xf32>
    %19 = tpu.iota {dimensions = array<i32: 1>} : vector<8x128xi32>
    %c64_i32 = arith.constant 64 : i32
    %20 = vector.broadcast %c64_i32 : i32 to vector<8x128xi32>
    %21 = arith.cmpi sge, %19, %20 : vector<8x128xi32>
    %c96_i32 = arith.constant 96 : i32
    %22 = vector.broadcast %c96_i32 : i32 to vector<8x128xi32>
    %23 = arith.cmpi slt, %19, %22 : vector<8x128xi32>
    %24 = arith.andi %21, %23 : vector<8x128xi1>
    %25 = vector.extract_strided_slice %18 {offsets = [0, 0], sizes = [8, 128], strides = [1, 1]} : vector<128x128xf32> to vector<8x128xf32>
    %c0_15 = arith.constant 0 : index
    %c0_16 = arith.constant 0 : index
    %26 = vector.load %arg13[%c0_15, %c0_16] : memref<8x32xf32, #tpu.memory_space<vmem>>, vector<8x32xf32>
    %c0_17 = arith.constant 0 : index
    %c0_18 = arith.constant 0 : index
    %27 = vector.load %arg8[%c0_17, %c0_18] : memref<32x128xf32, #tpu.memory_space<vmem>>, vector<32x128xf32>
    %cst_19 = arith.constant dense<0.000000e+00> : vector<8x128xf32>
    %28 = tpu.matmul %26, %27, %cst_19 {dimension_numbers = #tpu.dot_dimension_numbers<[1], [0], [0], [1], [0, 0, 1, 1], [], []>} : vector<8x32xf32>, vector<32x128xf32>, vector<8x128xf32> -> vector<8x128xf32>
    %29 = arith.addf %25, %28 : vector<8x128xf32>
    %30 = math.tanh %29 : vector<8x128xf32>
    %31 = arith.negf %29 : vector<8x128xf32>
    %32 = math.exp %31 : vector<8x128xf32>
    %cst_20 = arith.constant 1.000000e+00 : f32
    %33 = vector.broadcast %cst_20 : f32 to vector<8x128xf32>
    %34 = arith.addf %33, %32 : vector<8x128xf32>
    %35 = arith.divf %33, %34 : vector<8x128xf32>
    %36 = arith.select %24, %30, %35 : vector<8x128xi1>, vector<8x128xf32>
    %37 = vector.extract_strided_slice %36 {offsets = [0, 0], sizes = [8, 32], strides = [1, 1]} : vector<8x128xf32> to vector<8x32xf32>
    %38 = vector.extract_strided_slice %36 {offsets = [0, 32], sizes = [8, 32], strides = [1, 1]} : vector<8x128xf32> to vector<8x32xf32>
    %39 = vector.extract_strided_slice %36 {offsets = [0, 64], sizes = [8, 32], strides = [1, 1]} : vector<8x128xf32> to vector<8x32xf32>
    %40 = vector.extract_strided_slice %36 {offsets = [0, 96], sizes = [8, 32], strides = [1, 1]} : vector<8x128xf32> to vector<8x32xf32>
    %c0_21 = arith.constant 0 : index
    %c0_22 = arith.constant 0 : index
    %41 = vector.load %arg14[%c0_21, %c0_22] : memref<8x32xf32, #tpu.memory_space<vmem>>, vector<8x32xf32>
    %42 = arith.mulf %37, %41 : vector<8x32xf32>
    %43 = arith.mulf %38, %39 : vector<8x32xf32>
    %44 = arith.addf %42, %43 : vector<8x32xf32>
    %45 = math.tanh %44 : vector<8x32xf32>
    %46 = arith.mulf %40, %45 : vector<8x32xf32>
    %c0_23 = arith.constant 0 : index
    %c0_24 = arith.constant 0 : index
    %47 = vector.load %arg13[%c0_23, %c0_24] : memref<8x32xf32, #tpu.memory_space<vmem>>, vector<8x32xf32>
    tpu.vector_store %arg13[%c0_23, %c0_24], %46 {strides = array<i32>} : memref<8x32xf32, #tpu.memory_space<vmem>>, vector<8x32xf32>,
    %c0_25 = arith.constant 0 : index
    %c0_26 = arith.constant 0 : index
    %48 = vector.load %arg14[%c0_25, %c0_26] : memref<8x32xf32, #tpu.memory_space<vmem>>, vector<8x32xf32>
    tpu.vector_store %arg14[%c0_25, %c0_26], %44 {strides = array<i32>} : memref<8x32xf32, #tpu.memory_space<vmem>>, vector<8x32xf32>,
    %c0_27 = arith.constant 0 : index
    %c0_28 = arith.constant 0 : index
    %49 = vector.load %arg11[%c0_27, %c0_28] : memref<128x32xf32, #tpu.memory_space<vmem>>, vector<8x32xf32>
    tpu.vector_store %arg11[%c0_27, %c0_28], %46 {strides = array<i32>} : memref<128x32xf32, #tpu.memory_space<vmem>>, vector<8x32xf32>,
    %c0_29 = arith.constant 0 : index
    %c0_30 = arith.constant 0 : index
    %50 = vector.load %arg12[%c0_29, %c0_30] : memref<128x32xf32, #tpu.memory_space<vmem>>, vector<8x32xf32>
    tpu.vector_store %arg12[%c0_29, %c0_30], %44 {strides = array<i32>} : memref<128x32xf32, #tpu.memory_space<vmem>>, vector<8x32xf32>,
    %51 = vector.extract_strided_slice %18 {offsets = [8, 0], sizes = [8, 128], strides = [1, 1]} : vector<128x128xf32> to vector<8x128xf32>
    %c0_31 = arith.constant 0 : index
    %c0_32 = arith.constant 0 : index
    %52 = vector.load %arg13[%c0_31, %c0_32] : memref<8x32xf32, #tpu.memory_space<vmem>>, vector<8x32xf32>
    %c0_33 = arith.constant 0 : index
    %c0_34 = arith.constant 0 : index
    %53 = vector.load %arg8[%c0_33, %c0_34] : memref<32x128xf32, #tpu.memory_space<vmem>>, vector<32x128xf32>
    %cst_35 = arith.constant dense<0.000000e+00> : vector<8x128xf32>
    %54 = tpu.matmul %52, %53, %cst_35 {dimension_numbers = #tpu.dot_dimension_numbers<[1], [0], [0], [1], [0, 0, 1, 1], [], []>} : vector<8x32xf32>, vector<32x128xf32>, vector<8x128xf32> -> vector<8x128xf32>
    %55 = arith.addf %51, %54 : vector<8x128xf32>
    %56 = math.tanh %55 : vector<8x128xf32>
    %57 = arith.negf %55 : vector<8x128xf32>
    %58 = math.exp %57 : vector<8x128xf32>
    %cst_36 = arith.constant 1.000000e+00 : f32
    %59 = vector.broadcast %cst_36 : f32 to vector<8x128xf32>
    %60 = arith.addf %59, %58 : vector<8x128xf32>
    %61 = arith.divf %59, %60 : vector<8x128xf32>
    %62 = arith.select %24, %56, %61 : vector<8x128xi1>, vector<8x128xf32>
    %63 = vector.extract_strided_slice %62 {offsets = [0, 0], sizes = [8, 32], strides = [1, 1]} : vector<8x128xf32> to vector<8x32xf32>
    %64 = vector.extract_strided_slice %62 {offsets = [0, 32], sizes = [8, 32], strides = [1, 1]} : vector<8x128xf32> to vector<8x32xf32>
    %65 = vector.extract_strided_slice %62 {offsets = [0, 64], sizes = [8, 32], strides = [1, 1]} : vector<8x128xf32> to vector<8x32xf32>
    %66 = vector.extract_strided_slice %62 {offsets = [0, 96], sizes = [8, 32], strides = [1, 1]} : vector<8x128xf32> to vector<8x32xf32>
    %c0_37 = arith.constant 0 : index
    %c0_38 = arith.constant 0 : index
    %67 = vector.load %arg14[%c0_37, %c0_38] : memref<8x32xf32, #tpu.memory_space<vmem>>, vector<8x32xf32>
    %68 = arith.mulf %63, %67 : vector<8x32xf32>
    %69 = arith.mulf %64, %65 : vector<8x32xf32>
    %70 = arith.addf %68, %69 : vector<8x32xf32>
    %71 = math.tanh %70 : vector<8x32xf32>
    %72 = arith.mulf %66, %71 : vector<8x32xf32>
    %c0_39 = arith.constant 0 : index
    %c0_40 = arith.constant 0 : index
    %73 = vector.load %arg13[%c0_39, %c0_40] : memref<8x32xf32, #tpu.memory_space<vmem>>, vector<8x32xf32>
    tpu.vector_store %arg13[%c0_39, %c0_40], %72 {strides = array<i32>} : memref<8x32xf32, #tpu.memory_space<vmem>>, vector<8x32xf32>,
    %c0_41 = arith.constant 0 : index
    %c0_42 = arith.constant 0 : index
    %74 = vector.load %arg14[%c0_41, %c0_42] : memref<8x32xf32, #tpu.memory_space<vmem>>, vector<8x32xf32>
    tpu.vector_store %arg14[%c0_41, %c0_42], %70 {strides = array<i32>} : memref<8x32xf32, #tpu.memory_space<vmem>>, vector<8x32xf32>,
    %c8 = arith.constant 8 : index
    %c0_43 = arith.constant 0 : index
    %75 = vector.load %arg11[%c8, %c0_43] : memref<128x32xf32, #tpu.memory_space<vmem>>, vector<8x32xf32>
    tpu.vector_store %arg11[%c8, %c0_43], %72 {strides = array<i32>} : memref<128x32xf32, #tpu.memory_space<vmem>>, vector<8x32xf32>,
    %c8_44 = arith.constant 8 : index
    %c0_45 = arith.constant 0 : index
    %76 = vector.load %arg12[%c8_44, %c0_45] : memref<128x32xf32, #tpu.memory_space<vmem>>, vector<8x32xf32>
    tpu.vector_store %arg12[%c8_44, %c0_45], %70 {strides = array<i32>} : memref<128x32xf32, #tpu.memory_space<vmem>>, vector<8x32xf32>,
    %77 = vector.extract_strided_slice %18 {offsets = [16, 0], sizes = [8, 128], strides = [1, 1]} : vector<128x128xf32> to vector<8x128xf32>
    %c0_46 = arith.constant 0 : index
    %c0_47 = arith.constant 0 : index
    %78 = vector.load %arg13[%c0_46, %c0_47] : memref<8x32xf32, #tpu.memory_space<vmem>>, vector<8x32xf32>
    %c0_48 = arith.constant 0 : index
    %c0_49 = arith.constant 0 : index
    %79 = vector.load %arg8[%c0_48, %c0_49] : memref<32x128xf32, #tpu.memory_space<vmem>>, vector<32x128xf32>
    %cst_50 = arith.constant dense<0.000000e+00> : vector<8x128xf32>
    %80 = tpu.matmul %78, %79, %cst_50 {dimension_numbers = #tpu.dot_dimension_numbers<[1], [0], [0], [1], [0, 0, 1, 1], [], []>} : vector<8x32xf32>, vector<32x128xf32>, vector<8x128xf32> -> vector<8x128xf32>
    %81 = arith.addf %77, %80 : vector<8x128xf32>
    %82 = math.tanh %81 : vector<8x128xf32>
    %83 = arith.negf %81 : vector<8x128xf32>
    %84 = math.exp %83 : vector<8x128xf32>
    %cst_51 = arith.constant 1.000000e+00 : f32
    %85 = vector.broadcast %cst_51 : f32 to vector<8x128xf32>
    %86 = arith.addf %85, %84 : vector<8x128xf32>
    %87 = arith.divf %85, %86 : vector<8x128xf32>
    %88 = arith.select %24, %82, %87 : vector<8x128xi1>, vector<8x128xf32>
    %89 = vector.extract_strided_slice %88 {offsets = [0, 0], sizes = [8, 32], strides = [1, 1]} : vector<8x128xf32> to vector<8x32xf32>
    %90 = vector.extract_strided_slice %88 {offsets = [0, 32], sizes = [8, 32], strides = [1, 1]} : vector<8x128xf32> to vector<8x32xf32>
    %91 = vector.extract_strided_slice %88 {offsets = [0, 64], sizes = [8, 32], strides = [1, 1]} : vector<8x128xf32> to vector<8x32xf32>
    %92 = vector.extract_strided_slice %88 {offsets = [0, 96], sizes = [8, 32], strides = [1, 1]} : vector<8x128xf32> to vector<8x32xf32>
    %c0_52 = arith.constant 0 : index
    %c0_53 = arith.constant 0 : index
    %93 = vector.load %arg14[%c0_52, %c0_53] : memref<8x32xf32, #tpu.memory_space<vmem>>, vector<8x32xf32>
    %94 = arith.mulf %89, %93 : vector<8x32xf32>
    %95 = arith.mulf %90, %91 : vector<8x32xf32>
    %96 = arith.addf %94, %95 : vector<8x32xf32>
    %97 = math.tanh %96 : vector<8x32xf32>
    %98 = arith.mulf %92, %97 : vector<8x32xf32>
    %c0_54 = arith.constant 0 : index
    %c0_55 = arith.constant 0 : index
    %99 = vector.load %arg13[%c0_54, %c0_55] : memref<8x32xf32, #tpu.memory_space<vmem>>, vector<8x32xf32>
    tpu.vector_store %arg13[%c0_54, %c0_55], %98 {strides = array<i32>} : memref<8x32xf32, #tpu.memory_space<vmem>>, vector<8x32xf32>,
    %c0_56 = arith.constant 0 : index
    %c0_57 = arith.constant 0 : index
    %100 = vector.load %arg14[%c0_56, %c0_57] : memref<8x32xf32, #tpu.memory_space<vmem>>, vector<8x32xf32>
    tpu.vector_store %arg14[%c0_56, %c0_57], %96 {strides = array<i32>} : memref<8x32xf32, #tpu.memory_space<vmem>>, vector<8x32xf32>,
    %c16 = arith.constant 16 : index
    %c0_58 = arith.constant 0 : index
    %101 = vector.load %arg11[%c16, %c0_58] : memref<128x32xf32, #tpu.memory_space<vmem>>, vector<8x32xf32>
    tpu.vector_store %arg11[%c16, %c0_58], %98 {strides = array<i32>} : memref<128x32xf32, #tpu.memory_space<vmem>>, vector<8x32xf32>,
    %c16_59 = arith.constant 16 : index
    %c0_60 = arith.constant 0 : index
    %102 = vector.load %arg12[%c16_59, %c0_60] : memref<128x32xf32, #tpu.memory_space<vmem>>, vector<8x32xf32>
    tpu.vector_store %arg12[%c16_59, %c0_60], %96 {strides = array<i32>} : memref<128x32xf32, #tpu.memory_space<vmem>>, vector<8x32xf32>,
    %103 = vector.extract_strided_slice %18 {offsets = [24, 0], sizes = [8, 128], strides = [1, 1]} : vector<128x128xf32> to vector<8x128xf32>
    %c0_61 = arith.constant 0 : index
    %c0_62 = arith.constant 0 : index
    %104 = vector.load %arg13[%c0_61, %c0_62] : memref<8x32xf32, #tpu.memory_space<vmem>>, vector<8x32xf32>
    %c0_63 = arith.constant 0 : index
    %c0_64 = arith.constant 0 : index
    %105 = vector.load %arg8[%c0_63, %c0_64] : memref<32x128xf32, #tpu.memory_space<vmem>>, vector<32x128xf32>
    %cst_65 = arith.constant dense<0.000000e+00> : vector<8x128xf32>
    %106 = tpu.matmul %104, %105, %cst_65 {dimension_numbers = #tpu.dot_dimension_numbers<[1], [0], [0], [1], [0, 0, 1, 1], [], []>} : vector<8x32xf32>, vector<32x128xf32>, vector<8x128xf32> -> vector<8x128xf32>
    %107 = arith.addf %103, %106 : vector<8x128xf32>
    %108 = math.tanh %107 : vector<8x128xf32>
    %109 = arith.negf %107 : vector<8x128xf32>
    %110 = math.exp %109 : vector<8x128xf32>
    %cst_66 = arith.constant 1.000000e+00 : f32
    %111 = vector.broadcast %cst_66 : f32 to vector<8x128xf32>
    %112 = arith.addf %111, %110 : vector<8x128xf32>
    %113 = arith.divf %111, %112 : vector<8x128xf32>
    %114 = arith.select %24, %108, %113 : vector<8x128xi1>, vector<8x128xf32>
    %115 = vector.extract_strided_slice %114 {offsets = [0, 0], sizes = [8, 32], strides = [1, 1]} : vector<8x128xf32> to vector<8x32xf32>
    %116 = vector.extract_strided_slice %114 {offsets = [0, 32], sizes = [8, 32], strides = [1, 1]} : vector<8x128xf32> to vector<8x32xf32>
    %117 = vector.extract_strided_slice %114 {offsets = [0, 64], sizes = [8, 32], strides = [1, 1]} : vector<8x128xf32> to vector<8x32xf32>
    %118 = vector.extract_strided_slice %114 {offsets = [0, 96], sizes = [8, 32], strides = [1, 1]} : vector<8x128xf32> to vector<8x32xf32>
    %c0_67 = arith.constant 0 : index
    %c0_68 = arith.constant 0 : index
    %119 = vector.load %arg14[%c0_67, %c0_68] : memref<8x32xf32, #tpu.memory_space<vmem>>, vector<8x32xf32>
    %120 = arith.mulf %115, %119 : vector<8x32xf32>
    %121 = arith.mulf %116, %117 : vector<8x32xf32>
    %122 = arith.addf %120, %121 : vector<8x32xf32>
    %123 = math.tanh %122 : vector<8x32xf32>
    %124 = arith.mulf %118, %123 : vector<8x32xf32>
    %c0_69 = arith.constant 0 : index
    %c0_70 = arith.constant 0 : index
    %125 = vector.load %arg13[%c0_69, %c0_70] : memref<8x32xf32, #tpu.memory_space<vmem>>, vector<8x32xf32>
    tpu.vector_store %arg13[%c0_69, %c0_70], %124 {strides = array<i32>} : memref<8x32xf32, #tpu.memory_space<vmem>>, vector<8x32xf32>,
    %c0_71 = arith.constant 0 : index
    %c0_72 = arith.constant 0 : index
    %126 = vector.load %arg14[%c0_71, %c0_72] : memref<8x32xf32, #tpu.memory_space<vmem>>, vector<8x32xf32>
    tpu.vector_store %arg14[%c0_71, %c0_72], %122 {strides = array<i32>} : memref<8x32xf32, #tpu.memory_space<vmem>>, vector<8x32xf32>,
    %c24 = arith.constant 24 : index
    %c0_73 = arith.constant 0 : index
    %127 = vector.load %arg11[%c24, %c0_73] : memref<128x32xf32, #tpu.memory_space<vmem>>, vector<8x32xf32>
    tpu.vector_store %arg11[%c24, %c0_73], %124 {strides = array<i32>} : memref<128x32xf32, #tpu.memory_space<vmem>>, vector<8x32xf32>,
    %c24_74 = arith.constant 24 : index
    %c0_75 = arith.constant 0 : index
    %128 = vector.load %arg12[%c24_74, %c0_75] : memref<128x32xf32, #tpu.memory_space<vmem>>, vector<8x32xf32>
    tpu.vector_store %arg12[%c24_74, %c0_75], %122 {strides = array<i32>} : memref<128x32xf32, #tpu.memory_space<vmem>>, vector<8x32xf32>,
    %129 = vector.extract_strided_slice %18 {offsets = [32, 0], sizes = [8, 128], strides = [1, 1]} : vector<128x128xf32> to vector<8x128xf32>
    %c0_76 = arith.constant 0 : index
    %c0_77 = arith.constant 0 : index
    %130 = vector.load %arg13[%c0_76, %c0_77] : memref<8x32xf32, #tpu.memory_space<vmem>>, vector<8x32xf32>
    %c0_78 = arith.constant 0 : index
    %c0_79 = arith.constant 0 : index
    %131 = vector.load %arg8[%c0_78, %c0_79] : memref<32x128xf32, #tpu.memory_space<vmem>>, vector<32x128xf32>
    %cst_80 = arith.constant dense<0.000000e+00> : vector<8x128xf32>
    %132 = tpu.matmul %130, %131, %cst_80 {dimension_numbers = #tpu.dot_dimension_numbers<[1], [0], [0], [1], [0, 0, 1, 1], [], []>} : vector<8x32xf32>, vector<32x128xf32>, vector<8x128xf32> -> vector<8x128xf32>
    %133 = arith.addf %129, %132 : vector<8x128xf32>
    %134 = math.tanh %133 : vector<8x128xf32>
    %135 = arith.negf %133 : vector<8x128xf32>
    %136 = math.exp %135 : vector<8x128xf32>
    %cst_81 = arith.constant 1.000000e+00 : f32
    %137 = vector.broadcast %cst_81 : f32 to vector<8x128xf32>
    %138 = arith.addf %137, %136 : vector<8x128xf32>
    %139 = arith.divf %137, %138 : vector<8x128xf32>
    %140 = arith.select %24, %134, %139 : vector<8x128xi1>, vector<8x128xf32>
    %141 = vector.extract_strided_slice %140 {offsets = [0, 0], sizes = [8, 32], strides = [1, 1]} : vector<8x128xf32> to vector<8x32xf32>
    %142 = vector.extract_strided_slice %140 {offsets = [0, 32], sizes = [8, 32], strides = [1, 1]} : vector<8x128xf32> to vector<8x32xf32>
    %143 = vector.extract_strided_slice %140 {offsets = [0, 64], sizes = [8, 32], strides = [1, 1]} : vector<8x128xf32> to vector<8x32xf32>
    %144 = vector.extract_strided_slice %140 {offsets = [0, 96], sizes = [8, 32], strides = [1, 1]} : vector<8x128xf32> to vector<8x32xf32>
    %c0_82 = arith.constant 0 : index
    %c0_83 = arith.constant 0 : index
    %145 = vector.load %arg14[%c0_82, %c0_83] : memref<8x32xf32, #tpu.memory_space<vmem>>, vector<8x32xf32>
    %146 = arith.mulf %141, %145 : vector<8x32xf32>
    %147 = arith.mulf %142, %143 : vector<8x32xf32>
    %148 = arith.addf %146, %147 : vector<8x32xf32>
    %149 = math.tanh %148 : vector<8x32xf32>
    %150 = arith.mulf %144, %149 : vector<8x32xf32>
    %c0_84 = arith.constant 0 : index
    %c0_85 = arith.constant 0 : index
    %151 = vector.load %arg13[%c0_84, %c0_85] : memref<8x32xf32, #tpu.memory_space<vmem>>, vector<8x32xf32>
    tpu.vector_store %arg13[%c0_84, %c0_85], %150 {strides = array<i32>} : memref<8x32xf32, #tpu.memory_space<vmem>>, vector<8x32xf32>,
    %c0_86 = arith.constant 0 : index
    %c0_87 = arith.constant 0 : index
    %152 = vector.load %arg14[%c0_86, %c0_87] : memref<8x32xf32, #tpu.memory_space<vmem>>, vector<8x32xf32>
    tpu.vector_store %arg14[%c0_86, %c0_87], %148 {strides = array<i32>} : memref<8x32xf32, #tpu.memory_space<vmem>>, vector<8x32xf32>,
    %c32 = arith.constant 32 : index
    %c0_88 = arith.constant 0 : index
    %153 = vector.load %arg11[%c32, %c0_88] : memref<128x32xf32, #tpu.memory_space<vmem>>, vector<8x32xf32>
    tpu.vector_store %arg11[%c32, %c0_88], %150 {strides = array<i32>} : memref<128x32xf32, #tpu.memory_space<vmem>>, vector<8x32xf32>,
    %c32_89 = arith.constant 32 : index
    %c0_90 = arith.constant 0 : index
    %154 = vector.load %arg12[%c32_89, %c0_90] : memref<128x32xf32, #tpu.memory_space<vmem>>, vector<8x32xf32>
    tpu.vector_store %arg12[%c32_89, %c0_90], %148 {strides = array<i32>} : memref<128x32xf32, #tpu.memory_space<vmem>>, vector<8x32xf32>,
    %155 = vector.extract_strided_slice %18 {offsets = [40, 0], sizes = [8, 128], strides = [1, 1]} : vector<128x128xf32> to vector<8x128xf32>
    %c0_91 = arith.constant 0 : index
    %c0_92 = arith.constant 0 : index
    %156 = vector.load %arg13[%c0_91, %c0_92] : memref<8x32xf32, #tpu.memory_space<vmem>>, vector<8x32xf32>
    %c0_93 = arith.constant 0 : index
    %c0_94 = arith.constant 0 : index
    %157 = vector.load %arg8[%c0_93, %c0_94] : memref<32x128xf32, #tpu.memory_space<vmem>>, vector<32x128xf32>
    %cst_95 = arith.constant dense<0.000000e+00> : vector<8x128xf32>
    %158 = tpu.matmul %156, %157, %cst_95 {dimension_numbers = #tpu.dot_dimension_numbers<[1], [0], [0], [1], [0, 0, 1, 1], [], []>} : vector<8x32xf32>, vector<32x128xf32>, vector<8x128xf32> -> vector<8x128xf32>
    %159 = arith.addf %155, %158 : vector<8x128xf32>
    %160 = math.tanh %159 : vector<8x128xf32>
    %161 = arith.negf %159 : vector<8x128xf32>
    %162 = math.exp %161 : vector<8x128xf32>
    %cst_96 = arith.constant 1.000000e+00 : f32
    %163 = vector.broadcast %cst_96 : f32 to vector<8x128xf32>
    %164 = arith.addf %163, %162 : vector<8x128xf32>
    %165 = arith.divf %163, %164 : vector<8x128xf32>
    %166 = arith.select %24, %160, %165 : vector<8x128xi1>, vector<8x128xf32>
    %167 = vector.extract_strided_slice %166 {offsets = [0, 0], sizes = [8, 32], strides = [1, 1]} : vector<8x128xf32> to vector<8x32xf32>
    %168 = vector.extract_strided_slice %166 {offsets = [0, 32], sizes = [8, 32], strides = [1, 1]} : vector<8x128xf32> to vector<8x32xf32>
    %169 = vector.extract_strided_slice %166 {offsets = [0, 64], sizes = [8, 32], strides = [1, 1]} : vector<8x128xf32> to vector<8x32xf32>
    %170 = vector.extract_strided_slice %166 {offsets = [0, 96], sizes = [8, 32], strides = [1, 1]} : vector<8x128xf32> to vector<8x32xf32>
    %c0_97 = arith.constant 0 : index
    %c0_98 = arith.constant 0 : index
    %171 = vector.load %arg14[%c0_97, %c0_98] : memref<8x32xf32, #tpu.memory_space<vmem>>, vector<8x32xf32>
    %172 = arith.mulf %167, %171 : vector<8x32xf32>
    %173 = arith.mulf %168, %169 : vector<8x32xf32>
    %174 = arith.addf %172, %173 : vector<8x32xf32>
    %175 = math.tanh %174 : vector<8x32xf32>
    %176 = arith.mulf %170, %175 : vector<8x32xf32>
    %c0_99 = arith.constant 0 : index
    %c0_100 = arith.constant 0 : index
    %177 = vector.load %arg13[%c0_99, %c0_100] : memref<8x32xf32, #tpu.memory_space<vmem>>, vector<8x32xf32>
    tpu.vector_store %arg13[%c0_99, %c0_100], %176 {strides = array<i32>} : memref<8x32xf32, #tpu.memory_space<vmem>>, vector<8x32xf32>,
    %c0_101 = arith.constant 0 : index
    %c0_102 = arith.constant 0 : index
    %178 = vector.load %arg14[%c0_101, %c0_102] : memref<8x32xf32, #tpu.memory_space<vmem>>, vector<8x32xf32>
    tpu.vector_store %arg14[%c0_101, %c0_102], %174 {strides = array<i32>} : memref<8x32xf32, #tpu.memory_space<vmem>>, vector<8x32xf32>,
    %c40 = arith.constant 40 : index
    %c0_103 = arith.constant 0 : index
    %179 = vector.load %arg11[%c40, %c0_103] : memref<128x32xf32, #tpu.memory_space<vmem>>, vector<8x32xf32>
    tpu.vector_store %arg11[%c40, %c0_103], %176 {strides = array<i32>} : memref<128x32xf32, #tpu.memory_space<vmem>>, vector<8x32xf32>,
    %c40_104 = arith.constant 40 : index
    %c0_105 = arith.constant 0 : index
    %180 = vector.load %arg12[%c40_104, %c0_105] : memref<128x32xf32, #tpu.memory_space<vmem>>, vector<8x32xf32>
    tpu.vector_store %arg12[%c40_104, %c0_105], %174 {strides = array<i32>} : memref<128x32xf32, #tpu.memory_space<vmem>>, vector<8x32xf32>,
    %181 = vector.extract_strided_slice %18 {offsets = [48, 0], sizes = [8, 128], strides = [1, 1]} : vector<128x128xf32> to vector<8x128xf32>
    %c0_106 = arith.constant 0 : index
    %c0_107 = arith.constant 0 : index
    %182 = vector.load %arg13[%c0_106, %c0_107] : memref<8x32xf32, #tpu.memory_space<vmem>>, vector<8x32xf32>
    %c0_108 = arith.constant 0 : index
    %c0_109 = arith.constant 0 : index
    %183 = vector.load %arg8[%c0_108, %c0_109] : memref<32x128xf32, #tpu.memory_space<vmem>>, vector<32x128xf32>
    %cst_110 = arith.constant dense<0.000000e+00> : vector<8x128xf32>
    %184 = tpu.matmul %182, %183, %cst_110 {dimension_numbers = #tpu.dot_dimension_numbers<[1], [0], [0], [1], [0, 0, 1, 1], [], []>} : vector<8x32xf32>, vector<32x128xf32>, vector<8x128xf32> -> vector<8x128xf32>
    %185 = arith.addf %181, %184 : vector<8x128xf32>
    %186 = math.tanh %185 : vector<8x128xf32>
    %187 = arith.negf %185 : vector<8x128xf32>
    %188 = math.exp %187 : vector<8x128xf32>
    %cst_111 = arith.constant 1.000000e+00 : f32
    %189 = vector.broadcast %cst_111 : f32 to vector<8x128xf32>
    %190 = arith.addf %189, %188 : vector<8x128xf32>
    %191 = arith.divf %189, %190 : vector<8x128xf32>
    %192 = arith.select %24, %186, %191 : vector<8x128xi1>, vector<8x128xf32>
    %193 = vector.extract_strided_slice %192 {offsets = [0, 0], sizes = [8, 32], strides = [1, 1]} : vector<8x128xf32> to vector<8x32xf32>
    %194 = vector.extract_strided_slice %192 {offsets = [0, 32], sizes = [8, 32], strides = [1, 1]} : vector<8x128xf32> to vector<8x32xf32>
    %195 = vector.extract_strided_slice %192 {offsets = [0, 64], sizes = [8, 32], strides = [1, 1]} : vector<8x128xf32> to vector<8x32xf32>
    %196 = vector.extract_strided_slice %192 {offsets = [0, 96], sizes = [8, 32], strides = [1, 1]} : vector<8x128xf32> to vector<8x32xf32>
    %c0_112 = arith.constant 0 : index
    %c0_113 = arith.constant 0 : index
    %197 = vector.load %arg14[%c0_112, %c0_113] : memref<8x32xf32, #tpu.memory_space<vmem>>, vector<8x32xf32>
    %198 = arith.mulf %193, %197 : vector<8x32xf32>
    %199 = arith.mulf %194, %195 : vector<8x32xf32>
    %200 = arith.addf %198, %199 : vector<8x32xf32>
    %201 = math.tanh %200 : vector<8x32xf32>
    %202 = arith.mulf %196, %201 : vector<8x32xf32>
    %c0_114 = arith.constant 0 : index
    %c0_115 = arith.constant 0 : index
    %203 = vector.load %arg13[%c0_114, %c0_115] : memref<8x32xf32, #tpu.memory_space<vmem>>, vector<8x32xf32>
    tpu.vector_store %arg13[%c0_114, %c0_115], %202 {strides = array<i32>} : memref<8x32xf32, #tpu.memory_space<vmem>>, vector<8x32xf32>,
    %c0_116 = arith.constant 0 : index
    %c0_117 = arith.constant 0 : index
    %204 = vector.load %arg14[%c0_116, %c0_117] : memref<8x32xf32, #tpu.memory_space<vmem>>, vector<8x32xf32>
    tpu.vector_store %arg14[%c0_116, %c0_117], %200 {strides = array<i32>} : memref<8x32xf32, #tpu.memory_space<vmem>>, vector<8x32xf32>,
    %c48 = arith.constant 48 : index
    %c0_118 = arith.constant 0 : index
    %205 = vector.load %arg11[%c48, %c0_118] : memref<128x32xf32, #tpu.memory_space<vmem>>, vector<8x32xf32>
    tpu.vector_store %arg11[%c48, %c0_118], %202 {strides = array<i32>} : memref<128x32xf32, #tpu.memory_space<vmem>>, vector<8x32xf32>,
    %c48_119 = arith.constant 48 : index
    %c0_120 = arith.constant 0 : index
    %206 = vector.load %arg12[%c48_119, %c0_120] : memref<128x32xf32, #tpu.memory_space<vmem>>, vector<8x32xf32>
    tpu.vector_store %arg12[%c48_119, %c0_120], %200 {strides = array<i32>} : memref<128x32xf32, #tpu.memory_space<vmem>>, vector<8x32xf32>,
    %207 = vector.extract_strided_slice %18 {offsets = [56, 0], sizes = [8, 128], strides = [1, 1]} : vector<128x128xf32> to vector<8x128xf32>
    %c0_121 = arith.constant 0 : index
    %c0_122 = arith.constant 0 : index
    %208 = vector.load %arg13[%c0_121, %c0_122] : memref<8x32xf32, #tpu.memory_space<vmem>>, vector<8x32xf32>
    %c0_123 = arith.constant 0 : index
    %c0_124 = arith.constant 0 : index
    %209 = vector.load %arg8[%c0_123, %c0_124] : memref<32x128xf32, #tpu.memory_space<vmem>>, vector<32x128xf32>
    %cst_125 = arith.constant dense<0.000000e+00> : vector<8x128xf32>
    %210 = tpu.matmul %208, %209, %cst_125 {dimension_numbers = #tpu.dot_dimension_numbers<[1], [0], [0], [1], [0, 0, 1, 1], [], []>} : vector<8x32xf32>, vector<32x128xf32>, vector<8x128xf32> -> vector<8x128xf32>
    %211 = arith.addf %207, %210 : vector<8x128xf32>
    %212 = math.tanh %211 : vector<8x128xf32>
    %213 = arith.negf %211 : vector<8x128xf32>
    %214 = math.exp %213 : vector<8x128xf32>
    %cst_126 = arith.constant 1.000000e+00 : f32
    %215 = vector.broadcast %cst_126 : f32 to vector<8x128xf32>
    %216 = arith.addf %215, %214 : vector<8x128xf32>
    %217 = arith.divf %215, %216 : vector<8x128xf32>
    %218 = arith.select %24, %212, %217 : vector<8x128xi1>, vector<8x128xf32>
    %219 = vector.extract_strided_slice %218 {offsets = [0, 0], sizes = [8, 32], strides = [1, 1]} : vector<8x128xf32> to vector<8x32xf32>
    %220 = vector.extract_strided_slice %218 {offsets = [0, 32], sizes = [8, 32], strides = [1, 1]} : vector<8x128xf32> to vector<8x32xf32>
    %221 = vector.extract_strided_slice %218 {offsets = [0, 64], sizes = [8, 32], strides = [1, 1]} : vector<8x128xf32> to vector<8x32xf32>
    %222 = vector.extract_strided_slice %218 {offsets = [0, 96], sizes = [8, 32], strides = [1, 1]} : vector<8x128xf32> to vector<8x32xf32>
    %c0_127 = arith.constant 0 : index
    %c0_128 = arith.constant 0 : index
    %223 = vector.load %arg14[%c0_127, %c0_128] : memref<8x32xf32, #tpu.memory_space<vmem>>, vector<8x32xf32>
    %224 = arith.mulf %219, %223 : vector<8x32xf32>
    %225 = arith.mulf %220, %221 : vector<8x32xf32>
    %226 = arith.addf %224, %225 : vector<8x32xf32>
    %227 = math.tanh %226 : vector<8x32xf32>
    %228 = arith.mulf %222, %227 : vector<8x32xf32>
    %c0_129 = arith.constant 0 : index
    %c0_130 = arith.constant 0 : index
    %229 = vector.load %arg13[%c0_129, %c0_130] : memref<8x32xf32, #tpu.memory_space<vmem>>, vector<8x32xf32>
    tpu.vector_store %arg13[%c0_129, %c0_130], %228 {strides = array<i32>} : memref<8x32xf32, #tpu.memory_space<vmem>>, vector<8x32xf32>,
    %c0_131 = arith.constant 0 : index
    %c0_132 = arith.constant 0 : index
    %230 = vector.load %arg14[%c0_131, %c0_132] : memref<8x32xf32, #tpu.memory_space<vmem>>, vector<8x32xf32>
    tpu.vector_store %arg14[%c0_131, %c0_132], %226 {strides = array<i32>} : memref<8x32xf32, #tpu.memory_space<vmem>>, vector<8x32xf32>,
    %c56 = arith.constant 56 : index
    %c0_133 = arith.constant 0 : index
    %231 = vector.load %arg11[%c56, %c0_133] : memref<128x32xf32, #tpu.memory_space<vmem>>, vector<8x32xf32>
    tpu.vector_store %arg11[%c56, %c0_133], %228 {strides = array<i32>} : memref<128x32xf32, #tpu.memory_space<vmem>>, vector<8x32xf32>,
    %c56_134 = arith.constant 56 : index
    %c0_135 = arith.constant 0 : index
    %232 = vector.load %arg12[%c56_134, %c0_135] : memref<128x32xf32, #tpu.memory_space<vmem>>, vector<8x32xf32>
    tpu.vector_store %arg12[%c56_134, %c0_135], %226 {strides = array<i32>} : memref<128x32xf32, #tpu.memory_space<vmem>>, vector<8x32xf32>,
    %233 = vector.extract_strided_slice %18 {offsets = [64, 0], sizes = [8, 128], strides = [1, 1]} : vector<128x128xf32> to vector<8x128xf32>
    %c0_136 = arith.constant 0 : index
    %c0_137 = arith.constant 0 : index
    %234 = vector.load %arg13[%c0_136, %c0_137] : memref<8x32xf32, #tpu.memory_space<vmem>>, vector<8x32xf32>
    %c0_138 = arith.constant 0 : index
    %c0_139 = arith.constant 0 : index
    %235 = vector.load %arg8[%c0_138, %c0_139] : memref<32x128xf32, #tpu.memory_space<vmem>>, vector<32x128xf32>
    %cst_140 = arith.constant dense<0.000000e+00> : vector<8x128xf32>
    %236 = tpu.matmul %234, %235, %cst_140 {dimension_numbers = #tpu.dot_dimension_numbers<[1], [0], [0], [1], [0, 0, 1, 1], [], []>} : vector<8x32xf32>, vector<32x128xf32>, vector<8x128xf32> -> vector<8x128xf32>
    %237 = arith.addf %233, %236 : vector<8x128xf32>
    %238 = math.tanh %237 : vector<8x128xf32>
    %239 = arith.negf %237 : vector<8x128xf32>
    %240 = math.exp %239 : vector<8x128xf32>
    %cst_141 = arith.constant 1.000000e+00 : f32
    %241 = vector.broadcast %cst_141 : f32 to vector<8x128xf32>
    %242 = arith.addf %241, %240 : vector<8x128xf32>
    %243 = arith.divf %241, %242 : vector<8x128xf32>
    %244 = arith.select %24, %238, %243 : vector<8x128xi1>, vector<8x128xf32>
    %245 = vector.extract_strided_slice %244 {offsets = [0, 0], sizes = [8, 32], strides = [1, 1]} : vector<8x128xf32> to vector<8x32xf32>
    %246 = vector.extract_strided_slice %244 {offsets = [0, 32], sizes = [8, 32], strides = [1, 1]} : vector<8x128xf32> to vector<8x32xf32>
    %247 = vector.extract_strided_slice %244 {offsets = [0, 64], sizes = [8, 32], strides = [1, 1]} : vector<8x128xf32> to vector<8x32xf32>
    %248 = vector.extract_strided_slice %244 {offsets = [0, 96], sizes = [8, 32], strides = [1, 1]} : vector<8x128xf32> to vector<8x32xf32>
    %c0_142 = arith.constant 0 : index
    %c0_143 = arith.constant 0 : index
    %249 = vector.load %arg14[%c0_142, %c0_143] : memref<8x32xf32, #tpu.memory_space<vmem>>, vector<8x32xf32>
    %250 = arith.mulf %245, %249 : vector<8x32xf32>
    %251 = arith.mulf %246, %247 : vector<8x32xf32>
    %252 = arith.addf %250, %251 : vector<8x32xf32>
    %253 = math.tanh %252 : vector<8x32xf32>
    %254 = arith.mulf %248, %253 : vector<8x32xf32>
    %c0_144 = arith.constant 0 : index
    %c0_145 = arith.constant 0 : index
    %255 = vector.load %arg13[%c0_144, %c0_145] : memref<8x32xf32, #tpu.memory_space<vmem>>, vector<8x32xf32>
    tpu.vector_store %arg13[%c0_144, %c0_145], %254 {strides = array<i32>} : memref<8x32xf32, #tpu.memory_space<vmem>>, vector<8x32xf32>,
    %c0_146 = arith.constant 0 : index
    %c0_147 = arith.constant 0 : index
    %256 = vector.load %arg14[%c0_146, %c0_147] : memref<8x32xf32, #tpu.memory_space<vmem>>, vector<8x32xf32>
    tpu.vector_store %arg14[%c0_146, %c0_147], %252 {strides = array<i32>} : memref<8x32xf32, #tpu.memory_space<vmem>>, vector<8x32xf32>,
    %c64 = arith.constant 64 : index
    %c0_148 = arith.constant 0 : index
    %257 = vector.load %arg11[%c64, %c0_148] : memref<128x32xf32, #tpu.memory_space<vmem>>, vector<8x32xf32>
    tpu.vector_store %arg11[%c64, %c0_148], %254 {strides = array<i32>} : memref<128x32xf32, #tpu.memory_space<vmem>>, vector<8x32xf32>,
    %c64_149 = arith.constant 64 : index
    %c0_150 = arith.constant 0 : index
    %258 = vector.load %arg12[%c64_149, %c0_150] : memref<128x32xf32, #tpu.memory_space<vmem>>, vector<8x32xf32>
    tpu.vector_store %arg12[%c64_149, %c0_150], %252 {strides = array<i32>} : memref<128x32xf32, #tpu.memory_space<vmem>>, vector<8x32xf32>,
    %259 = vector.extract_strided_slice %18 {offsets = [72, 0], sizes = [8, 128], strides = [1, 1]} : vector<128x128xf32> to vector<8x128xf32>
    %c0_151 = arith.constant 0 : index
    %c0_152 = arith.constant 0 : index
    %260 = vector.load %arg13[%c0_151, %c0_152] : memref<8x32xf32, #tpu.memory_space<vmem>>, vector<8x32xf32>
    %c0_153 = arith.constant 0 : index
    %c0_154 = arith.constant 0 : index
    %261 = vector.load %arg8[%c0_153, %c0_154] : memref<32x128xf32, #tpu.memory_space<vmem>>, vector<32x128xf32>
    %cst_155 = arith.constant dense<0.000000e+00> : vector<8x128xf32>
    %262 = tpu.matmul %260, %261, %cst_155 {dimension_numbers = #tpu.dot_dimension_numbers<[1], [0], [0], [1], [0, 0, 1, 1], [], []>} : vector<8x32xf32>, vector<32x128xf32>, vector<8x128xf32> -> vector<8x128xf32>
    %263 = arith.addf %259, %262 : vector<8x128xf32>
    %264 = math.tanh %263 : vector<8x128xf32>
    %265 = arith.negf %263 : vector<8x128xf32>
    %266 = math.exp %265 : vector<8x128xf32>
    %cst_156 = arith.constant 1.000000e+00 : f32
    %267 = vector.broadcast %cst_156 : f32 to vector<8x128xf32>
    %268 = arith.addf %267, %266 : vector<8x128xf32>
    %269 = arith.divf %267, %268 : vector<8x128xf32>
    %270 = arith.select %24, %264, %269 : vector<8x128xi1>, vector<8x128xf32>
    %271 = vector.extract_strided_slice %270 {offsets = [0, 0], sizes = [8, 32], strides = [1, 1]} : vector<8x128xf32> to vector<8x32xf32>
    %272 = vector.extract_strided_slice %270 {offsets = [0, 32], sizes = [8, 32], strides = [1, 1]} : vector<8x128xf32> to vector<8x32xf32>
    %273 = vector.extract_strided_slice %270 {offsets = [0, 64], sizes = [8, 32], strides = [1, 1]} : vector<8x128xf32> to vector<8x32xf32>
    %274 = vector.extract_strided_slice %270 {offsets = [0, 96], sizes = [8, 32], strides = [1, 1]} : vector<8x128xf32> to vector<8x32xf32>
    %c0_157 = arith.constant 0 : index
    %c0_158 = arith.constant 0 : index
    %275 = vector.load %arg14[%c0_157, %c0_158] : memref<8x32xf32, #tpu.memory_space<vmem>>, vector<8x32xf32>
    %276 = arith.mulf %271, %275 : vector<8x32xf32>
    %277 = arith.mulf %272, %273 : vector<8x32xf32>
    %278 = arith.addf %276, %277 : vector<8x32xf32>
    %279 = math.tanh %278 : vector<8x32xf32>
    %280 = arith.mulf %274, %279 : vector<8x32xf32>
    %c0_159 = arith.constant 0 : index
    %c0_160 = arith.constant 0 : index
    %281 = vector.load %arg13[%c0_159, %c0_160] : memref<8x32xf32, #tpu.memory_space<vmem>>, vector<8x32xf32>
    tpu.vector_store %arg13[%c0_159, %c0_160], %280 {strides = array<i32>} : memref<8x32xf32, #tpu.memory_space<vmem>>, vector<8x32xf32>,
    %c0_161 = arith.constant 0 : index
    %c0_162 = arith.constant 0 : index
    %282 = vector.load %arg14[%c0_161, %c0_162] : memref<8x32xf32, #tpu.memory_space<vmem>>, vector<8x32xf32>
    tpu.vector_store %arg14[%c0_161, %c0_162], %278 {strides = array<i32>} : memref<8x32xf32, #tpu.memory_space<vmem>>, vector<8x32xf32>,
    %c72 = arith.constant 72 : index
    %c0_163 = arith.constant 0 : index
    %283 = vector.load %arg11[%c72, %c0_163] : memref<128x32xf32, #tpu.memory_space<vmem>>, vector<8x32xf32>
    tpu.vector_store %arg11[%c72, %c0_163], %280 {strides = array<i32>} : memref<128x32xf32, #tpu.memory_space<vmem>>, vector<8x32xf32>,
    %c72_164 = arith.constant 72 : index
    %c0_165 = arith.constant 0 : index
    %284 = vector.load %arg12[%c72_164, %c0_165] : memref<128x32xf32, #tpu.memory_space<vmem>>, vector<8x32xf32>
    tpu.vector_store %arg12[%c72_164, %c0_165], %278 {strides = array<i32>} : memref<128x32xf32, #tpu.memory_space<vmem>>, vector<8x32xf32>,
    %285 = vector.extract_strided_slice %18 {offsets = [80, 0], sizes = [8, 128], strides = [1, 1]} : vector<128x128xf32> to vector<8x128xf32>
    %c0_166 = arith.constant 0 : index
    %c0_167 = arith.constant 0 : index
    %286 = vector.load %arg13[%c0_166, %c0_167] : memref<8x32xf32, #tpu.memory_space<vmem>>, vector<8x32xf32>
    %c0_168 = arith.constant 0 : index
    %c0_169 = arith.constant 0 : index
    %287 = vector.load %arg8[%c0_168, %c0_169] : memref<32x128xf32, #tpu.memory_space<vmem>>, vector<32x128xf32>
    %cst_170 = arith.constant dense<0.000000e+00> : vector<8x128xf32>
    %288 = tpu.matmul %286, %287, %cst_170 {dimension_numbers = #tpu.dot_dimension_numbers<[1], [0], [0], [1], [0, 0, 1, 1], [], []>} : vector<8x32xf32>, vector<32x128xf32>, vector<8x128xf32> -> vector<8x128xf32>
    %289 = arith.addf %285, %288 : vector<8x128xf32>
    %290 = math.tanh %289 : vector<8x128xf32>
    %291 = arith.negf %289 : vector<8x128xf32>
    %292 = math.exp %291 : vector<8x128xf32>
    %cst_171 = arith.constant 1.000000e+00 : f32
    %293 = vector.broadcast %cst_171 : f32 to vector<8x128xf32>
    %294 = arith.addf %293, %292 : vector<8x128xf32>
    %295 = arith.divf %293, %294 : vector<8x128xf32>
    %296 = arith.select %24, %290, %295 : vector<8x128xi1>, vector<8x128xf32>
    %297 = vector.extract_strided_slice %296 {offsets = [0, 0], sizes = [8, 32], strides = [1, 1]} : vector<8x128xf32> to vector<8x32xf32>
    %298 = vector.extract_strided_slice %296 {offsets = [0, 32], sizes = [8, 32], strides = [1, 1]} : vector<8x128xf32> to vector<8x32xf32>
    %299 = vector.extract_strided_slice %296 {offsets = [0, 64], sizes = [8, 32], strides = [1, 1]} : vector<8x128xf32> to vector<8x32xf32>
    %300 = vector.extract_strided_slice %296 {offsets = [0, 96], sizes = [8, 32], strides = [1, 1]} : vector<8x128xf32> to vector<8x32xf32>
    %c0_172 = arith.constant 0 : index
    %c0_173 = arith.constant 0 : index
    %301 = vector.load %arg14[%c0_172, %c0_173] : memref<8x32xf32, #tpu.memory_space<vmem>>, vector<8x32xf32>
    %302 = arith.mulf %297, %301 : vector<8x32xf32>
    %303 = arith.mulf %298, %299 : vector<8x32xf32>
    %304 = arith.addf %302, %303 : vector<8x32xf32>
    %305 = math.tanh %304 : vector<8x32xf32>
    %306 = arith.mulf %300, %305 : vector<8x32xf32>
    %c0_174 = arith.constant 0 : index
    %c0_175 = arith.constant 0 : index
    %307 = vector.load %arg13[%c0_174, %c0_175] : memref<8x32xf32, #tpu.memory_space<vmem>>, vector<8x32xf32>
    tpu.vector_store %arg13[%c0_174, %c0_175], %306 {strides = array<i32>} : memref<8x32xf32, #tpu.memory_space<vmem>>, vector<8x32xf32>,
    %c0_176 = arith.constant 0 : index
    %c0_177 = arith.constant 0 : index
    %308 = vector.load %arg14[%c0_176, %c0_177] : memref<8x32xf32, #tpu.memory_space<vmem>>, vector<8x32xf32>
    tpu.vector_store %arg14[%c0_176, %c0_177], %304 {strides = array<i32>} : memref<8x32xf32, #tpu.memory_space<vmem>>, vector<8x32xf32>,
    %c80 = arith.constant 80 : index
    %c0_178 = arith.constant 0 : index
    %309 = vector.load %arg11[%c80, %c0_178] : memref<128x32xf32, #tpu.memory_space<vmem>>, vector<8x32xf32>
    tpu.vector_store %arg11[%c80, %c0_178], %306 {strides = array<i32>} : memref<128x32xf32, #tpu.memory_space<vmem>>, vector<8x32xf32>,
    %c80_179 = arith.constant 80 : index
    %c0_180 = arith.constant 0 : index
    %310 = vector.load %arg12[%c80_179, %c0_180] : memref<128x32xf32, #tpu.memory_space<vmem>>, vector<8x32xf32>
    tpu.vector_store %arg12[%c80_179, %c0_180], %304 {strides = array<i32>} : memref<128x32xf32, #tpu.memory_space<vmem>>, vector<8x32xf32>,
    %311 = vector.extract_strided_slice %18 {offsets = [88, 0], sizes = [8, 128], strides = [1, 1]} : vector<128x128xf32> to vector<8x128xf32>
    %c0_181 = arith.constant 0 : index
    %c0_182 = arith.constant 0 : index
    %312 = vector.load %arg13[%c0_181, %c0_182] : memref<8x32xf32, #tpu.memory_space<vmem>>, vector<8x32xf32>
    %c0_183 = arith.constant 0 : index
    %c0_184 = arith.constant 0 : index
    %313 = vector.load %arg8[%c0_183, %c0_184] : memref<32x128xf32, #tpu.memory_space<vmem>>, vector<32x128xf32>
    %cst_185 = arith.constant dense<0.000000e+00> : vector<8x128xf32>
    %314 = tpu.matmul %312, %313, %cst_185 {dimension_numbers = #tpu.dot_dimension_numbers<[1], [0], [0], [1], [0, 0, 1, 1], [], []>} : vector<8x32xf32>, vector<32x128xf32>, vector<8x128xf32> -> vector<8x128xf32>
    %315 = arith.addf %311, %314 : vector<8x128xf32>
    %316 = math.tanh %315 : vector<8x128xf32>
    %317 = arith.negf %315 : vector<8x128xf32>
    %318 = math.exp %317 : vector<8x128xf32>
    %cst_186 = arith.constant 1.000000e+00 : f32
    %319 = vector.broadcast %cst_186 : f32 to vector<8x128xf32>
    %320 = arith.addf %319, %318 : vector<8x128xf32>
    %321 = arith.divf %319, %320 : vector<8x128xf32>
    %322 = arith.select %24, %316, %321 : vector<8x128xi1>, vector<8x128xf32>
    %323 = vector.extract_strided_slice %322 {offsets = [0, 0], sizes = [8, 32], strides = [1, 1]} : vector<8x128xf32> to vector<8x32xf32>
    %324 = vector.extract_strided_slice %322 {offsets = [0, 32], sizes = [8, 32], strides = [1, 1]} : vector<8x128xf32> to vector<8x32xf32>
    %325 = vector.extract_strided_slice %322 {offsets = [0, 64], sizes = [8, 32], strides = [1, 1]} : vector<8x128xf32> to vector<8x32xf32>
    %326 = vector.extract_strided_slice %322 {offsets = [0, 96], sizes = [8, 32], strides = [1, 1]} : vector<8x128xf32> to vector<8x32xf32>
    %c0_187 = arith.constant 0 : index
    %c0_188 = arith.constant 0 : index
    %327 = vector.load %arg14[%c0_187, %c0_188] : memref<8x32xf32, #tpu.memory_space<vmem>>, vector<8x32xf32>
    %328 = arith.mulf %323, %327 : vector<8x32xf32>
    %329 = arith.mulf %324, %325 : vector<8x32xf32>
    %330 = arith.addf %328, %329 : vector<8x32xf32>
    %331 = math.tanh %330 : vector<8x32xf32>
    %332 = arith.mulf %326, %331 : vector<8x32xf32>
    %c0_189 = arith.constant 0 : index
    %c0_190 = arith.constant 0 : index
    %333 = vector.load %arg13[%c0_189, %c0_190] : memref<8x32xf32, #tpu.memory_space<vmem>>, vector<8x32xf32>
    tpu.vector_store %arg13[%c0_189, %c0_190], %332 {strides = array<i32>} : memref<8x32xf32, #tpu.memory_space<vmem>>, vector<8x32xf32>,
    %c0_191 = arith.constant 0 : index
    %c0_192 = arith.constant 0 : index
    %334 = vector.load %arg14[%c0_191, %c0_192] : memref<8x32xf32, #tpu.memory_space<vmem>>, vector<8x32xf32>
    tpu.vector_store %arg14[%c0_191, %c0_192], %330 {strides = array<i32>} : memref<8x32xf32, #tpu.memory_space<vmem>>, vector<8x32xf32>,
    %c88 = arith.constant 88 : index
    %c0_193 = arith.constant 0 : index
    %335 = vector.load %arg11[%c88, %c0_193] : memref<128x32xf32, #tpu.memory_space<vmem>>, vector<8x32xf32>
    tpu.vector_store %arg11[%c88, %c0_193], %332 {strides = array<i32>} : memref<128x32xf32, #tpu.memory_space<vmem>>, vector<8x32xf32>,
    %c88_194 = arith.constant 88 : index
    %c0_195 = arith.constant 0 : index
    %336 = vector.load %arg12[%c88_194, %c0_195] : memref<128x32xf32, #tpu.memory_space<vmem>>, vector<8x32xf32>
    tpu.vector_store %arg12[%c88_194, %c0_195], %330 {strides = array<i32>} : memref<128x32xf32, #tpu.memory_space<vmem>>, vector<8x32xf32>,
    %337 = vector.extract_strided_slice %18 {offsets = [96, 0], sizes = [8, 128], strides = [1, 1]} : vector<128x128xf32> to vector<8x128xf32>
    %c0_196 = arith.constant 0 : index
    %c0_197 = arith.constant 0 : index
    %338 = vector.load %arg13[%c0_196, %c0_197] : memref<8x32xf32, #tpu.memory_space<vmem>>, vector<8x32xf32>
    %c0_198 = arith.constant 0 : index
    %c0_199 = arith.constant 0 : index
    %339 = vector.load %arg8[%c0_198, %c0_199] : memref<32x128xf32, #tpu.memory_space<vmem>>, vector<32x128xf32>
    %cst_200 = arith.constant dense<0.000000e+00> : vector<8x128xf32>
    %340 = tpu.matmul %338, %339, %cst_200 {dimension_numbers = #tpu.dot_dimension_numbers<[1], [0], [0], [1], [0, 0, 1, 1], [], []>} : vector<8x32xf32>, vector<32x128xf32>, vector<8x128xf32> -> vector<8x128xf32>
    %341 = arith.addf %337, %340 : vector<8x128xf32>
    %342 = math.tanh %341 : vector<8x128xf32>
    %343 = arith.negf %341 : vector<8x128xf32>
    %344 = math.exp %343 : vector<8x128xf32>
    %cst_201 = arith.constant 1.000000e+00 : f32
    %345 = vector.broadcast %cst_201 : f32 to vector<8x128xf32>
    %346 = arith.addf %345, %344 : vector<8x128xf32>
    %347 = arith.divf %345, %346 : vector<8x128xf32>
    %348 = arith.select %24, %342, %347 : vector<8x128xi1>, vector<8x128xf32>
    %349 = vector.extract_strided_slice %348 {offsets = [0, 0], sizes = [8, 32], strides = [1, 1]} : vector<8x128xf32> to vector<8x32xf32>
    %350 = vector.extract_strided_slice %348 {offsets = [0, 32], sizes = [8, 32], strides = [1, 1]} : vector<8x128xf32> to vector<8x32xf32>
    %351 = vector.extract_strided_slice %348 {offsets = [0, 64], sizes = [8, 32], strides = [1, 1]} : vector<8x128xf32> to vector<8x32xf32>
    %352 = vector.extract_strided_slice %348 {offsets = [0, 96], sizes = [8, 32], strides = [1, 1]} : vector<8x128xf32> to vector<8x32xf32>
    %c0_202 = arith.constant 0 : index
    %c0_203 = arith.constant 0 : index
    %353 = vector.load %arg14[%c0_202, %c0_203] : memref<8x32xf32, #tpu.memory_space<vmem>>, vector<8x32xf32>
    %354 = arith.mulf %349, %353 : vector<8x32xf32>
    %355 = arith.mulf %350, %351 : vector<8x32xf32>
    %356 = arith.addf %354, %355 : vector<8x32xf32>
    %357 = math.tanh %356 : vector<8x32xf32>
    %358 = arith.mulf %352, %357 : vector<8x32xf32>
    %c0_204 = arith.constant 0 : index
    %c0_205 = arith.constant 0 : index
    %359 = vector.load %arg13[%c0_204, %c0_205] : memref<8x32xf32, #tpu.memory_space<vmem>>, vector<8x32xf32>
    tpu.vector_store %arg13[%c0_204, %c0_205], %358 {strides = array<i32>} : memref<8x32xf32, #tpu.memory_space<vmem>>, vector<8x32xf32>,
    %c0_206 = arith.constant 0 : index
    %c0_207 = arith.constant 0 : index
    %360 = vector.load %arg14[%c0_206, %c0_207] : memref<8x32xf32, #tpu.memory_space<vmem>>, vector<8x32xf32>
    tpu.vector_store %arg14[%c0_206, %c0_207], %356 {strides = array<i32>} : memref<8x32xf32, #tpu.memory_space<vmem>>, vector<8x32xf32>,
    %c96 = arith.constant 96 : index
    %c0_208 = arith.constant 0 : index
    %361 = vector.load %arg11[%c96, %c0_208] : memref<128x32xf32, #tpu.memory_space<vmem>>, vector<8x32xf32>
    tpu.vector_store %arg11[%c96, %c0_208], %358 {strides = array<i32>} : memref<128x32xf32, #tpu.memory_space<vmem>>, vector<8x32xf32>,
    %c96_209 = arith.constant 96 : index
    %c0_210 = arith.constant 0 : index
    %362 = vector.load %arg12[%c96_209, %c0_210] : memref<128x32xf32, #tpu.memory_space<vmem>>, vector<8x32xf32>
    tpu.vector_store %arg12[%c96_209, %c0_210], %356 {strides = array<i32>} : memref<128x32xf32, #tpu.memory_space<vmem>>, vector<8x32xf32>,
    %363 = vector.extract_strided_slice %18 {offsets = [104, 0], sizes = [8, 128], strides = [1, 1]} : vector<128x128xf32> to vector<8x128xf32>
    %c0_211 = arith.constant 0 : index
    %c0_212 = arith.constant 0 : index
    %364 = vector.load %arg13[%c0_211, %c0_212] : memref<8x32xf32, #tpu.memory_space<vmem>>, vector<8x32xf32>
    %c0_213 = arith.constant 0 : index
    %c0_214 = arith.constant 0 : index
    %365 = vector.load %arg8[%c0_213, %c0_214] : memref<32x128xf32, #tpu.memory_space<vmem>>, vector<32x128xf32>
    %cst_215 = arith.constant dense<0.000000e+00> : vector<8x128xf32>
    %366 = tpu.matmul %364, %365, %cst_215 {dimension_numbers = #tpu.dot_dimension_numbers<[1], [0], [0], [1], [0, 0, 1, 1], [], []>} : vector<8x32xf32>, vector<32x128xf32>, vector<8x128xf32> -> vector<8x128xf32>
    %367 = arith.addf %363, %366 : vector<8x128xf32>
    %368 = math.tanh %367 : vector<8x128xf32>
    %369 = arith.negf %367 : vector<8x128xf32>
    %370 = math.exp %369 : vector<8x128xf32>
    %cst_216 = arith.constant 1.000000e+00 : f32
    %371 = vector.broadcast %cst_216 : f32 to vector<8x128xf32>
    %372 = arith.addf %371, %370 : vector<8x128xf32>
    %373 = arith.divf %371, %372 : vector<8x128xf32>
    %374 = arith.select %24, %368, %373 : vector<8x128xi1>, vector<8x128xf32>
    %375 = vector.extract_strided_slice %374 {offsets = [0, 0], sizes = [8, 32], strides = [1, 1]} : vector<8x128xf32> to vector<8x32xf32>
    %376 = vector.extract_strided_slice %374 {offsets = [0, 32], sizes = [8, 32], strides = [1, 1]} : vector<8x128xf32> to vector<8x32xf32>
    %377 = vector.extract_strided_slice %374 {offsets = [0, 64], sizes = [8, 32], strides = [1, 1]} : vector<8x128xf32> to vector<8x32xf32>
    %378 = vector.extract_strided_slice %374 {offsets = [0, 96], sizes = [8, 32], strides = [1, 1]} : vector<8x128xf32> to vector<8x32xf32>
    %c0_217 = arith.constant 0 : index
    %c0_218 = arith.constant 0 : index
    %379 = vector.load %arg14[%c0_217, %c0_218] : memref<8x32xf32, #tpu.memory_space<vmem>>, vector<8x32xf32>
    %380 = arith.mulf %375, %379 : vector<8x32xf32>
    %381 = arith.mulf %376, %377 : vector<8x32xf32>
    %382 = arith.addf %380, %381 : vector<8x32xf32>
    %383 = math.tanh %382 : vector<8x32xf32>
    %384 = arith.mulf %378, %383 : vector<8x32xf32>
    %c0_219 = arith.constant 0 : index
    %c0_220 = arith.constant 0 : index
    %385 = vector.load %arg13[%c0_219, %c0_220] : memref<8x32xf32, #tpu.memory_space<vmem>>, vector<8x32xf32>
    tpu.vector_store %arg13[%c0_219, %c0_220], %384 {strides = array<i32>} : memref<8x32xf32, #tpu.memory_space<vmem>>, vector<8x32xf32>,
    %c0_221 = arith.constant 0 : index
    %c0_222 = arith.constant 0 : index
    %386 = vector.load %arg14[%c0_221, %c0_222] : memref<8x32xf32, #tpu.memory_space<vmem>>, vector<8x32xf32>
    tpu.vector_store %arg14[%c0_221, %c0_222], %382 {strides = array<i32>} : memref<8x32xf32, #tpu.memory_space<vmem>>, vector<8x32xf32>,
    %c104 = arith.constant 104 : index
    %c0_223 = arith.constant 0 : index
    %387 = vector.load %arg11[%c104, %c0_223] : memref<128x32xf32, #tpu.memory_space<vmem>>, vector<8x32xf32>
    tpu.vector_store %arg11[%c104, %c0_223], %384 {strides = array<i32>} : memref<128x32xf32, #tpu.memory_space<vmem>>, vector<8x32xf32>,
    %c104_224 = arith.constant 104 : index
    %c0_225 = arith.constant 0 : index
    %388 = vector.load %arg12[%c104_224, %c0_225] : memref<128x32xf32, #tpu.memory_space<vmem>>, vector<8x32xf32>
    tpu.vector_store %arg12[%c104_224, %c0_225], %382 {strides = array<i32>} : memref<128x32xf32, #tpu.memory_space<vmem>>, vector<8x32xf32>,
    %389 = vector.extract_strided_slice %18 {offsets = [112, 0], sizes = [8, 128], strides = [1, 1]} : vector<128x128xf32> to vector<8x128xf32>
    %c0_226 = arith.constant 0 : index
    %c0_227 = arith.constant 0 : index
    %390 = vector.load %arg13[%c0_226, %c0_227] : memref<8x32xf32, #tpu.memory_space<vmem>>, vector<8x32xf32>
    %c0_228 = arith.constant 0 : index
    %c0_229 = arith.constant 0 : index
    %391 = vector.load %arg8[%c0_228, %c0_229] : memref<32x128xf32, #tpu.memory_space<vmem>>, vector<32x128xf32>
    %cst_230 = arith.constant dense<0.000000e+00> : vector<8x128xf32>
    %392 = tpu.matmul %390, %391, %cst_230 {dimension_numbers = #tpu.dot_dimension_numbers<[1], [0], [0], [1], [0, 0, 1, 1], [], []>} : vector<8x32xf32>, vector<32x128xf32>, vector<8x128xf32> -> vector<8x128xf32>
    %393 = arith.addf %389, %392 : vector<8x128xf32>
    %394 = math.tanh %393 : vector<8x128xf32>
    %395 = arith.negf %393 : vector<8x128xf32>
    %396 = math.exp %395 : vector<8x128xf32>
    %cst_231 = arith.constant 1.000000e+00 : f32
    %397 = vector.broadcast %cst_231 : f32 to vector<8x128xf32>
    %398 = arith.addf %397, %396 : vector<8x128xf32>
    %399 = arith.divf %397, %398 : vector<8x128xf32>
    %400 = arith.select %24, %394, %399 : vector<8x128xi1>, vector<8x128xf32>
    %401 = vector.extract_strided_slice %400 {offsets = [0, 0], sizes = [8, 32], strides = [1, 1]} : vector<8x128xf32> to vector<8x32xf32>
    %402 = vector.extract_strided_slice %400 {offsets = [0, 32], sizes = [8, 32], strides = [1, 1]} : vector<8x128xf32> to vector<8x32xf32>
    %403 = vector.extract_strided_slice %400 {offsets = [0, 64], sizes = [8, 32], strides = [1, 1]} : vector<8x128xf32> to vector<8x32xf32>
    %404 = vector.extract_strided_slice %400 {offsets = [0, 96], sizes = [8, 32], strides = [1, 1]} : vector<8x128xf32> to vector<8x32xf32>
    %c0_232 = arith.constant 0 : index
    %c0_233 = arith.constant 0 : index
    %405 = vector.load %arg14[%c0_232, %c0_233] : memref<8x32xf32, #tpu.memory_space<vmem>>, vector<8x32xf32>
    %406 = arith.mulf %401, %405 : vector<8x32xf32>
    %407 = arith.mulf %402, %403 : vector<8x32xf32>
    %408 = arith.addf %406, %407 : vector<8x32xf32>
    %409 = math.tanh %408 : vector<8x32xf32>
    %410 = arith.mulf %404, %409 : vector<8x32xf32>
    %c0_234 = arith.constant 0 : index
    %c0_235 = arith.constant 0 : index
    %411 = vector.load %arg13[%c0_234, %c0_235] : memref<8x32xf32, #tpu.memory_space<vmem>>, vector<8x32xf32>
    tpu.vector_store %arg13[%c0_234, %c0_235], %410 {strides = array<i32>} : memref<8x32xf32, #tpu.memory_space<vmem>>, vector<8x32xf32>,
    %c0_236 = arith.constant 0 : index
    %c0_237 = arith.constant 0 : index
    %412 = vector.load %arg14[%c0_236, %c0_237] : memref<8x32xf32, #tpu.memory_space<vmem>>, vector<8x32xf32>
    tpu.vector_store %arg14[%c0_236, %c0_237], %408 {strides = array<i32>} : memref<8x32xf32, #tpu.memory_space<vmem>>, vector<8x32xf32>,
    %c112 = arith.constant 112 : index
    %c0_238 = arith.constant 0 : index
    %413 = vector.load %arg11[%c112, %c0_238] : memref<128x32xf32, #tpu.memory_space<vmem>>, vector<8x32xf32>
    tpu.vector_store %arg11[%c112, %c0_238], %410 {strides = array<i32>} : memref<128x32xf32, #tpu.memory_space<vmem>>, vector<8x32xf32>,
    %c112_239 = arith.constant 112 : index
    %c0_240 = arith.constant 0 : index
    %414 = vector.load %arg12[%c112_239, %c0_240] : memref<128x32xf32, #tpu.memory_space<vmem>>, vector<8x32xf32>
    tpu.vector_store %arg12[%c112_239, %c0_240], %408 {strides = array<i32>} : memref<128x32xf32, #tpu.memory_space<vmem>>, vector<8x32xf32>,
    %415 = vector.extract_strided_slice %18 {offsets = [120, 0], sizes = [8, 128], strides = [1, 1]} : vector<128x128xf32> to vector<8x128xf32>
    %c0_241 = arith.constant 0 : index
    %c0_242 = arith.constant 0 : index
    %416 = vector.load %arg13[%c0_241, %c0_242] : memref<8x32xf32, #tpu.memory_space<vmem>>, vector<8x32xf32>
    %c0_243 = arith.constant 0 : index
    %c0_244 = arith.constant 0 : index
    %417 = vector.load %arg8[%c0_243, %c0_244] : memref<32x128xf32, #tpu.memory_space<vmem>>, vector<32x128xf32>
    %cst_245 = arith.constant dense<0.000000e+00> : vector<8x128xf32>
    %418 = tpu.matmul %416, %417, %cst_245 {dimension_numbers = #tpu.dot_dimension_numbers<[1], [0], [0], [1], [0, 0, 1, 1], [], []>} : vector<8x32xf32>, vector<32x128xf32>, vector<8x128xf32> -> vector<8x128xf32>
    %419 = arith.addf %415, %418 : vector<8x128xf32>
    %420 = math.tanh %419 : vector<8x128xf32>
    %421 = arith.negf %419 : vector<8x128xf32>
    %422 = math.exp %421 : vector<8x128xf32>
    %cst_246 = arith.constant 1.000000e+00 : f32
    %423 = vector.broadcast %cst_246 : f32 to vector<8x128xf32>
    %424 = arith.addf %423, %422 : vector<8x128xf32>
    %425 = arith.divf %423, %424 : vector<8x128xf32>
    %426 = arith.select %24, %420, %425 : vector<8x128xi1>, vector<8x128xf32>
    %427 = vector.extract_strided_slice %426 {offsets = [0, 0], sizes = [8, 32], strides = [1, 1]} : vector<8x128xf32> to vector<8x32xf32>
    %428 = vector.extract_strided_slice %426 {offsets = [0, 32], sizes = [8, 32], strides = [1, 1]} : vector<8x128xf32> to vector<8x32xf32>
    %429 = vector.extract_strided_slice %426 {offsets = [0, 64], sizes = [8, 32], strides = [1, 1]} : vector<8x128xf32> to vector<8x32xf32>
    %430 = vector.extract_strided_slice %426 {offsets = [0, 96], sizes = [8, 32], strides = [1, 1]} : vector<8x128xf32> to vector<8x32xf32>
    %c0_247 = arith.constant 0 : index
    %c0_248 = arith.constant 0 : index
    %431 = vector.load %arg14[%c0_247, %c0_248] : memref<8x32xf32, #tpu.memory_space<vmem>>, vector<8x32xf32>
    %432 = arith.mulf %427, %431 : vector<8x32xf32>
    %433 = arith.mulf %428, %429 : vector<8x32xf32>
    %434 = arith.addf %432, %433 : vector<8x32xf32>
    %435 = math.tanh %434 : vector<8x32xf32>
    %436 = arith.mulf %430, %435 : vector<8x32xf32>
    %c0_249 = arith.constant 0 : index
    %c0_250 = arith.constant 0 : index
    %437 = vector.load %arg13[%c0_249, %c0_250] : memref<8x32xf32, #tpu.memory_space<vmem>>, vector<8x32xf32>
    tpu.vector_store %arg13[%c0_249, %c0_250], %436 {strides = array<i32>} : memref<8x32xf32, #tpu.memory_space<vmem>>, vector<8x32xf32>,
    %c0_251 = arith.constant 0 : index
    %c0_252 = arith.constant 0 : index
    %438 = vector.load %arg14[%c0_251, %c0_252] : memref<8x32xf32, #tpu.memory_space<vmem>>, vector<8x32xf32>
    tpu.vector_store %arg14[%c0_251, %c0_252], %434 {strides = array<i32>} : memref<8x32xf32, #tpu.memory_space<vmem>>, vector<8x32xf32>,
    %c120 = arith.constant 120 : index
    %c0_253 = arith.constant 0 : index
    %439 = vector.load %arg11[%c120, %c0_253] : memref<128x32xf32, #tpu.memory_space<vmem>>, vector<8x32xf32>
    tpu.vector_store %arg11[%c120, %c0_253], %436 {strides = array<i32>} : memref<128x32xf32, #tpu.memory_space<vmem>>, vector<8x32xf32>,
    %c120_254 = arith.constant 120 : index
    %c0_255 = arith.constant 0 : index
    %440 = vector.load %arg12[%c120_254, %c0_255] : memref<128x32xf32, #tpu.memory_space<vmem>>, vector<8x32xf32>
    tpu.vector_store %arg12[%c120_254, %c0_255], %434 {strides = array<i32>} : memref<128x32xf32, #tpu.memory_space<vmem>>, vector<8x32xf32>,
    return
  }
  func.func @transform_0(%arg0: i32) -> (i32, i32) {
    %c0_i32 = arith.constant 0 : i32
    %c0_i32_0 = arith.constant 0 : i32
    return %arg0, %c0_i32 : i32, i32
  }
  func.func @transform_1(%arg0: i32) -> (i32, i32) {
    %c0_i32 = arith.constant 0 : i32
    %c0_i32_0 = arith.constant 0 : i32
    return %arg0, %c0_i32 : i32, i32
  }
  func.func @transform_2(%arg0: i32) -> (i32, i32) {
    %c0_i32 = arith.constant 0 : i32
    %c0_i32_0 = arith.constant 0 : i32
    return %arg0, %c0_i32 : i32, i32
  }
  func.func @transform_3(%arg0: i32) -> (i32, i32) {
    %c0_i32 = arith.constant 0 : i32
    %c0_i32_0 = arith.constant 0 : i32
    %c0_i32_1 = arith.constant 0 : i32
    return %c0_i32, %c0_i32_0 : i32, i32
  }
  func.func @transform_4(%arg0: i32) -> (i32, i32) {
    %c0_i32 = arith.constant 0 : i32
    %c0_i32_0 = arith.constant 0 : i32
    %c0_i32_1 = arith.constant 0 : i32
    return %c0_i32, %c0_i32_0 : i32, i32
  }
  func.func @transform_5(%arg0: i32) -> (i32, i32) {
    %c0_i32 = arith.constant 0 : i32
    %c0_i32_0 = arith.constant 0 : i32
    %c0_i32_1 = arith.constant 0 : i32
    return %c0_i32, %c0_i32_0 : i32, i32
  }
  func.func @transform_6(%arg0: i32) -> (i32, i32) {
    %c0_i32 = arith.constant 0 : i32
    %c0_i32_0 = arith.constant 0 : i32
    %c0_i32_1 = arith.constant 0 : i32
    return %c0_i32, %c0_i32_0 : i32, i32
  }
  func.func @transform_7(%arg0: i32) -> (i32, i32) {
    %c0_i32 = arith.constant 0 : i32
    %c0_i32_0 = arith.constant 0 : i32
    %c0_i32_1 = arith.constant 0 : i32
    return %c0_i32, %c0_i32_0 : i32, i32
  }
  func.func @transform_8(%arg0: i32) -> (i32, i32) {
    %c0_i32 = arith.constant 0 : i32
    %c0_i32_0 = arith.constant 0 : i32
    %c0_i32_1 = arith.constant 0 : i32
    return %c0_i32, %c0_i32_0 : i32, i32
  }
  func.func @transform_9(%arg0: i32) -> (i32, i32) {
    %c0_i32 = arith.constant 0 : i32
    %c0_i32_0 = arith.constant 0 : i32
    %c0_i32_1 = arith.constant 0 : i32
    return %c0_i32, %c0_i32_0 : i32, i32
  }
  func.func @transform_10(%arg0: i32) -> (i32, i32) {
    %c0_i32 = arith.constant 0 : i32
    %c0_i32_0 = arith.constant 0 : i32
    return %arg0, %c0_i32 : i32, i32
  }
  func.func @transform_11(%arg0: i32) -> (i32, i32) {
    %c0_i32 = arith.constant 0 : i32
    %c0_i32_0 = arith.constant 0 : i32
    return %arg0, %c0_i32 : i32, i32
  }
}

</mosaic_0001>

<llo_original>
// kernel: adaptive_lstm_sequence.1
$region0: #{adaptive_lstm_sequence.1}
  #allocation0 [shape = 'u32[]', space=smem, size = 0x4, offset = 0x4, fixed_abs, tag = 'smem constant byte address 0x4 - core index']
  #allocation1 [shape = 'u32[72,128]{1,0:T(1,128)}', space=vmem, size = 0x9000, scoped, tag = 'internal scratch']
  #allocation2 [shape = 'f32[8,32]{1,0:T(8,128)}', space=vmem, size = 0x1000, scoped, tag = 'scratch operand']
  #allocation3 [shape = 'f32[8,32]{1,0:T(8,128)}', space=vmem, size = 0x1000, scoped, tag = 'scratch operand']
  %s0 = inlined_call_operand.vmem [shape: f32[128,16], index: 0, kind: input, shape index: {}]
  %s1 = inlined_call_operand.vmem [shape: f32[128,8], index: 1, kind: input, shape index: {}]
  %s2 = inlined_call_operand.vmem [shape: f32[128,1], index: 2, kind: input, shape index: {}]
  %s3 = inlined_call_operand.vmem [shape: f32[16,128], index: 3, kind: input, shape index: {}]
  %s4 = inlined_call_operand.vmem [shape: f32[8,128], index: 4, kind: input, shape index: {}]
  %s5 = inlined_call_operand.vmem [shape: f32[1,128], index: 5, kind: input, shape index: {}]
  %s6 = inlined_call_operand.vmem [shape: f32[1,128], index: 6, kind: input, shape index: {}]
  %s7 = inlined_call_operand.vmem [shape: f32[32,128], index: 7, kind: input, shape index: {}]
  %s8 = inlined_call_operand.vmem [shape: f32[8,32], index: 8, kind: input, shape index: {}]
  %s9 = inlined_call_operand.vmem [shape: f32[8,32], index: 9, kind: input, shape index: {}]
  %s10 = inlined_call_operand.hbm [shape: f32[128,32], index: 10, kind: output, shape index: {0}]
  %s11 = inlined_call_operand.hbm [shape: f32[128,32], index: 11, kind: output, shape index: {1}]
  %12 = xla_tuple %s10, %s11
  %s13 = sld [smem:[#allocation0]]
  $region62: #{adaptive_lstm_sequence.1} parent=0
    _
  %s15 = ssub.s32 1, %s13
  %s16 = scalar_select 0, %s15, %s13
  $region1: #{adaptive_lstm_sequence.1} parent=0
    #allocation4 [shape = 'u8[65536]{0}', space=vmem, size = 0x10000, scoped, tag = 'output window, operand 0, single buffered']
    #allocation5 [shape = 's32[1]{0}', space=sflag, size = 0x4, scoped, tag = 'scoped memory for adaptive_lstm_sequence.1']
    #allocation6 [shape = 'u8[65536]{0}', space=vmem, size = 0x10000, scoped, tag = 'output window, operand 1, single buffered']
    #allocation7 [shape = 's32[1]{0}', space=sflag, size = 0x4, scoped, tag = 'scoped memory for adaptive_lstm_sequence.1']
    %17 = vsyncpa [#allocation5], 0
    %18 = vsyncpa [#allocation7], 0
    // Predicated region
    $region2: #{adaptive_lstm_sequence.1} parent=1 // pred_check
      _
    $region3: #{adaptive_lstm_sequence.1} parent=1 // pred_check_branch
      %20 = sbr.rel (0) target = $region5
    $region4: #{adaptive_lstm_sequence.1} parent=1 // pred_region
      _
    $region5: #{adaptive_lstm_sequence.1} parent=1 // pred_fallthru
      _
    // Predicated region
    $region6: #{adaptive_lstm_sequence.1} parent=1 // pred_check
      _
    $region7: #{adaptive_lstm_sequence.1} parent=1 // pred_check_branch
      %22 = sbr.rel (0) target = $region9
    $region8: #{adaptive_lstm_sequence.1} parent=1 // pred_region
      _
    $region9: #{adaptive_lstm_sequence.1} parent=1 // pred_fallthru
      _
    // Predicated region
    $region10: #{adaptive_lstm_sequence.1} parent=1 // pred_check
      _
    $region11: #{adaptive_lstm_sequence.1} parent=1 // pred_check_branch
      %24 = sbr.rel (0) target = $region13
    $region12: #{adaptive_lstm_sequence.1} parent=1 // pred_region
      _
    $region13: #{adaptive_lstm_sequence.1} parent=1 // pred_fallthru
      _
    // Predicated region
    $region14: #{adaptive_lstm_sequence.1} parent=1 // pred_check
      _
    $region15: #{adaptive_lstm_sequence.1} parent=1 // pred_check_branch
      %26 = sbr.rel (0) target = $region17
    $region16: #{adaptive_lstm_sequence.1} parent=1 // pred_region
      _
    $region17: #{adaptive_lstm_sequence.1} parent=1 // pred_fallthru
      _
    // Predicated region
    $region18: #{adaptive_lstm_sequence.1} parent=1 // pred_check
      _
    $region19: #{adaptive_lstm_sequence.1} parent=1 // pred_check_branch
      %28 = sbr.rel (0) target = $region21
    $region20: #{adaptive_lstm_sequence.1} parent=1 // pred_region
      _
    $region21: #{adaptive_lstm_sequence.1} parent=1 // pred_fallthru
      _
    // Predicated region
    $region22: #{adaptive_lstm_sequence.1} parent=1 // pred_check
      _
    $region23: #{adaptive_lstm_sequence.1} parent=1 // pred_check_branch
      %30 = sbr.rel (0) target = $region25
    $region24: #{adaptive_lstm_sequence.1} parent=1 // pred_region
      _
    $region25: #{adaptive_lstm_sequence.1} parent=1 // pred_fallthru
      _
    // Predicated region
    $region26: #{adaptive_lstm_sequence.1} parent=1 // pred_check
      _
    $region27: #{adaptive_lstm_sequence.1} parent=1 // pred_check_branch
      %32 = sbr.rel (0) target = $region29
    $region28: #{adaptive_lstm_sequence.1} parent=1 // pred_region
      _
    $region29: #{adaptive_lstm_sequence.1} parent=1 // pred_fallthru
      _
    // Predicated region
    $region30: #{adaptive_lstm_sequence.1} parent=1 // pred_check
      _
    $region31: #{adaptive_lstm_sequence.1} parent=1 // pred_check_branch
      %34 = sbr.rel (0) target = $region33
    $region32: #{adaptive_lstm_sequence.1} parent=1 // pred_region
      _
    $region33: #{adaptive_lstm_sequence.1} parent=1 // pred_fallthru
      _
    // Predicated region
    $region34: #{adaptive_lstm_sequence.1} parent=1 // pred_check
      _
    $region35: #{adaptive_lstm_sequence.1} parent=1 // pred_check_branch
      %36 = sbr.rel (0) target = $region37
    $region36: #{adaptive_lstm_sequence.1} parent=1 // pred_region
      _
    $region37: #{adaptive_lstm_sequence.1} parent=1 // pred_fallthru
      _
    // Predicated region
    $region38: #{adaptive_lstm_sequence.1} parent=1 // pred_check
      _
    $region39: #{adaptive_lstm_sequence.1} parent=1 // pred_check_branch
      %38 = sbr.rel (0) target = $region41
    $region40: #{adaptive_lstm_sequence.1} parent=1 // pred_region
      _
    $region41: #{adaptive_lstm_sequence.1} parent=1 // pred_fallthru
      _
    %p39 = scmp.eq.s32.totalorder 0, 0
    // Predicated region
    $region42: #{adaptive_lstm_sequence.1} parent=1 // pred_check
      %p40 = pneg %p39
    $region43: #{adaptive_lstm_sequence.1} parent=1 // pred_check_branch
      %42 = sbr.rel (%p40) target = $region45
    $region44: #{adaptive_lstm_sequence.1} parent=1 // pred_region
      %v43 = vld [vmem:[%s8] sm:$0xff]
      %vm44 = vcmask 261120
      %45 = vst.msk [vmem:[#allocation2] sm:$0xff] %vm44, %v43
      %v46 = vld [vmem:[%s9] sm:$0xff]
      %47 = vst.msk [vmem:[#allocation3] sm:$0xff] %vm44, %v46
    $region45: #{adaptive_lstm_sequence.1} parent=1 // pred_fallthru
      _
    %v48 = vld [vmem:[%s0] sm:$0xff]
    %v49 = vld [vmem:[%s0 + $0x8] sm:$0xff]
    %v50 = vld [vmem:[%s0 + $0x10] sm:$0xff]
    %v51 = vld [vmem:[%s0 + $0x18] sm:$0xff]
    %v52 = vld [vmem:[%s0 + $0x20] sm:$0xff]
    %v53 = vld [vmem:[%s0 + $0x28] sm:$0xff]
    %v54 = vld [vmem:[%s0 + $0x30] sm:$0xff]
    %v55 = vld [vmem:[%s0 + $0x38] sm:$0xff]
    %v56 = vld [vmem:[%s0 + $0x40] sm:$0xff]
    %v57 = vld [vmem:[%s0 + $0x48] sm:$0xff]
    %v58 = vld [vmem:[%s0 + $0x50] sm:$0xff]
    %v59 = vld [vmem:[%s0 + $0x58] sm:$0xff]
    %v60 = vld [vmem:[%s0 + $0x60] sm:$0xff]
    %v61 = vld [vmem:[%s0 + $0x68] sm:$0xff]
    %v62 = vld [vmem:[%s0 + $0x70] sm:$0xff]
    %v63 = vld [vmem:[%s0 + $0x78] sm:$0xff]
    %v64 = vld [vmem:[%s3] sm:$0xff]
    %v65 = vld [vmem:[%s3 + $0x8] sm:$0xff]
    %v66 = vld [vmem:[%s1] sm:$0xff]
    %v67 = vld [vmem:[%s1 + $0x8] sm:$0xff]
    %v68 = vld [vmem:[%s1 + $0x10] sm:$0xff]
    %v69 = vld [vmem:[%s1 + $0x18] sm:$0xff]
    %v70 = vld [vmem:[%s1 + $0x20] sm:$0xff]
    %v71 = vld [vmem:[%s1 + $0x28] sm:$0xff]
    %v72 = vld [vmem:[%s1 + $0x30] sm:$0xff]
    %v73 = vld [vmem:[%s1 + $0x38] sm:$0xff]
    %v74 = vld [vmem:[%s1 + $0x40] sm:$0xff]
    %v75 = vld [vmem:[%s1 + $0x48] sm:$0xff]
    %v76 = vld [vmem:[%s1 + $0x50] sm:$0xff]
    %v77 = vld [vmem:[%s1 + $0x58] sm:$0xff]
    %v78 = vld [vmem:[%s1 + $0x60] sm:$0xff]
    %v79 = vld [vmem:[%s1 + $0x68] sm:$0xff]
    %v80 = vld [vmem:[%s1 + $0x70] sm:$0xff]
    %v81 = vld [vmem:[%s1 + $0x78] sm:$0xff]
    %v82 = vld [vmem:[%s4] sm:$0xff]
    %vm83 = vcmask 64512
    %v85 = vsel %vm83, %v66, 0
    %v88 = vsel %vm83, %v67, 0
    %v91 = vsel %vm83, %v68, 0
    %v94 = vsel %vm83, %v69, 0
    %v97 = vsel %vm83, %v70, 0
    %v100 = vsel %vm83, %v71, 0
    %v103 = vsel %vm83, %v72, 0
    %v106 = vsel %vm83, %v73, 0
    %v109 = vsel %vm83, %v74, 0
    %v112 = vsel %vm83, %v75, 0
    %v115 = vsel %vm83, %v76, 0
    %v118 = vsel %vm83, %v77, 0
    %v121 = vsel %vm83, %v78, 0
    %v124 = vsel %vm83, %v79, 0
    %v127 = vsel %vm83, %v80, 0
    %v130 = vsel %vm83, %v81, 0
    %132 = vmatpush.msra.mxu0 0.0
    %133 = vmatpush.msra.mxu0 0.0
    %134 = vmatpush.msra.mxu0 0.0
    %135 = vmatpush.msra.mxu0 0.0
    %136 = vmatpush.msra.mxu0 0.0
    %137 = vmatpush.msra.mxu0 0.0
    %138 = vmatpush.msra.mxu0 0.0
    %139 = vmatpush.msra.mxu0 0.0
    %140 = vmatpush.msra.mxu0 0.0
    %141 = vmatpush.msra.mxu0 0.0
    %142 = vmatpush.msra.mxu0 0.0
    %143 = vmatpush.msra.mxu0 0.0
    %144 = vmatpush.msra.mxu0 0.0
    %145 = vmatpush.msra.mxu0 0.0
    %146 = vmatpush.msra.mxu0 0.0
    %147 = vmatpush.msra.mxu0 %v82
    %148 = vmatmul.f32.gmra.mxu0 %v85
    %v149 = vpop.f32.mrf.mxu0
    %v150 = vadd.f32 0.0, %v149
    %151 = vmatmul.f32.gmra.mxu0 %v88
    %v152 = vpop.f32.mrf.mxu0
    %v153 = vadd.f32 0.0, %v152
    %154 = vmatmul.f32.gmra.mxu0 %v91
    %v155 = vpop.f32.mrf.mxu0
    %v156 = vadd.f32 0.0, %v155
    %157 = vmatmul.f32.gmra.mxu0 %v94
    %v158 = vpop.f32.mrf.mxu0
    %v159 = vadd.f32 0.0, %v158
    %160 = vmatmul.f32.gmra.mxu0 %v97
    %v161 = vpop.f32.mrf.mxu0
    %v162 = vadd.f32 0.0, %v161
    %163 = vmatmul.f32.gmra.mxu0 %v100
    %v164 = vpop.f32.mrf.mxu0
    %v165 = vadd.f32 0.0, %v164
    %166 = vmatmul.f32.gmra.mxu0 %v103
    %v167 = vpop.f32.mrf.mxu0
    %v168 = vadd.f32 0.0, %v167
    %169 = vmatmul.f32.gmra.mxu0 %v106
    %v170 = vpop.f32.mrf.mxu0
    %v171 = vadd.f32 0.0, %v170
    %172 = vmatmul.f32.gmra.mxu0 %v109
    %v173 = vpop.f32.mrf.mxu0
    %v174 = vadd.f32 0.0, %v173
    %175 = vmatmul.f32.gmra.mxu0 %v112
    %v176 = vpop.f32.mrf.mxu0
    %v177 = vadd.f32 0.0, %v176
    %178 = vmatmul.f32.gmra.mxu0 %v115
    %v179 = vpop.f32.mrf.mxu0
    %v180 = vadd.f32 0.0, %v179
    %181 = vmatmul.f32.gmra.mxu0 %v118
    %v182 = vpop.f32.mrf.mxu0
    %v183 = vadd.f32 0.0, %v182
    %184 = vmatmul.f32.gmra.mxu0 %v121
    %v185 = vpop.f32.mrf.mxu0
    %v186 = vadd.f32 0.0, %v185
    %187 = vmatmul.f32.gmra.mxu0 %v124
    %v188 = vpop.f32.mrf.mxu0
    %v189 = vadd.f32 0.0, %v188
    %190 = vmatmul.f32.gmra.mxu0 %v127
    %v191 = vpop.f32.mrf.mxu0
    %v192 = vadd.f32 0.0, %v191
    %193 = vmatmul.f32.gmra.mxu0 %v130
    %v194 = vpop.f32.mrf.mxu0
    %v195 = vadd.f32 0.0, %v194
    %196 = vdwg.mxu0
    %vm197 = vcmask 130048
    %v199 = vsel %vm197, %v48, 0
    %v202 = vsel %vm197, %v49, 0
    %v205 = vsel %vm197, %v50, 0
    %v208 = vsel %vm197, %v51, 0
    %v211 = vsel %vm197, %v52, 0
    %v214 = vsel %vm197, %v53, 0
    %v217 = vsel %vm197, %v54, 0
    %v220 = vsel %vm197, %v55, 0
    %v223 = vsel %vm197, %v56, 0
    %v226 = vsel %vm197, %v57, 0
    %v229 = vsel %vm197, %v58, 0
    %v232 = vsel %vm197, %v59, 0
    %v235 = vsel %vm197, %v60, 0
    %v238 = vsel %vm197, %v61, 0
    %v241 = vsel %vm197, %v62, 0
    %v244 = vsel %vm197, %v63, 0
    %246 = vmatpush.msra.mxu0 0.0
    %247 = vmatpush.msra.mxu0 0.0
    %248 = vmatpush.msra.mxu0 0.0
    %249 = vmatpush.msra.mxu0 0.0
    %250 = vmatpush.msra.mxu0 0.0
    %251 = vmatpush.msra.mxu0 0.0
    %252 = vmatpush.msra.mxu0 0.0
    %253 = vmatpush.msra.mxu0 0.0
    %254 = vmatpush.msra.mxu0 0.0
    %255 = vmatpush.msra.mxu0 0.0
    %256 = vmatpush.msra.mxu0 0.0
    %257 = vmatpush.msra.mxu0 0.0
    %258 = vmatpush.msra.mxu0 0.0
    %259 = vmatpush.msra.mxu0 0.0
    %260 = vmatpush.msra.mxu0 %v65
    %261 = vmatpush.msra.mxu0 %v64
    %262 = vmatmul.f32.gmra.mxu0 %v199
    %v263 = vpop.f32.mrf.mxu0
    %v264 = vadd.f32 %v150, %v263
    %265 = vmatmul.f32.gmra.mxu0 %v202
    %v266 = vpop.f32.mrf.mxu0
    %v267 = vadd.f32 %v153, %v266
    %268 = vmatmul.f32.gmra.mxu0 %v205
    %v269 = vpop.f32.mrf.mxu0
    %v270 = vadd.f32 %v156, %v269
    %271 = vmatmul.f32.gmra.mxu0 %v208
    %v272 = vpop.f32.mrf.mxu0
    %v273 = vadd.f32 %v159, %v272
    %274 = vmatmul.f32.gmra.mxu0 %v211
    %v275 = vpop.f32.mrf.mxu0
    %v276 = vadd.f32 %v162, %v275
    %277 = vmatmul.f32.gmra.mxu0 %v214
    %v278 = vpop.f32.mrf.mxu0
    %v279 = vadd.f32 %v165, %v278
    %280 = vmatmul.f32.gmra.mxu0 %v217
    %v281 = vpop.f32.mrf.mxu0
    %v282 = vadd.f32 %v168, %v281
    %283 = vmatmul.f32.gmra.mxu0 %v220
    %v284 = vpop.f32.mrf.mxu0
    %v285 = vadd.f32 %v171, %v284
    %286 = vmatmul.f32.gmra.mxu0 %v223
    %v287 = vpop.f32.mrf.mxu0
    %v288 = vadd.f32 %v174, %v287
    %289 = vmatmul.f32.gmra.mxu0 %v226
    %v290 = vpop.f32.mrf.mxu0
    %v291 = vadd.f32 %v177, %v290
    %292 = vmatmul.f32.gmra.mxu0 %v229
    %v293 = vpop.f32.mrf.mxu0
    %v294 = vadd.f32 %v180, %v293
    %295 = vmatmul.f32.gmra.mxu0 %v232
    %v296 = vpop.f32.mrf.mxu0
    %v297 = vadd.f32 %v183, %v296
    %298 = vmatmul.f32.gmra.mxu0 %v235
    %v299 = vpop.f32.mrf.mxu0
    %v300 = vadd.f32 %v186, %v299
    %301 = vmatmul.f32.gmra.mxu0 %v238
    %v302 = vpop.f32.mrf.mxu0
    %v303 = vadd.f32 %v189, %v302
    %304 = vmatmul.f32.gmra.mxu0 %v241
    %v305 = vpop.f32.mrf.mxu0
    %v306 = vadd.f32 %v192, %v305
    %307 = vmatmul.f32.gmra.mxu0 %v244
    %v308 = vpop.f32.mrf.mxu0
    %v309 = vadd.f32 %v195, %v308
    %310 = vdwg.mxu0
    %v311 = vld [vmem:[%s2] sm:$0xff]
    %v312 = vld [vmem:[%s2 + $0x8] sm:$0xff]
    %v313 = vld [vmem:[%s2 + $0x10] sm:$0xff]
    %v314 = vld [vmem:[%s2 + $0x18] sm:$0xff]
    %v315 = vld [vmem:[%s2 + $0x20] sm:$0xff]
    %v316 = vld [vmem:[%s2 + $0x28] sm:$0xff]
    %v317 = vld [vmem:[%s2 + $0x30] sm:$0xff]
    %v318 = vld [vmem:[%s2 + $0x38] sm:$0xff]
    %v319 = vld [vmem:[%s2 + $0x40] sm:$0xff]
    %v320 = vld [vmem:[%s2 + $0x48] sm:$0xff]
    %v321 = vld [vmem:[%s2 + $0x50] sm:$0xff]
    %v322 = vld [vmem:[%s2 + $0x58] sm:$0xff]
    %v323 = vld [vmem:[%s2 + $0x60] sm:$0xff]
    %v324 = vld [vmem:[%s2 + $0x68] sm:$0xff]
    %v325 = vld [vmem:[%s2 + $0x70] sm:$0xff]
    %v326 = vld [vmem:[%s2 + $0x78] sm:$0xff]
    %v327 = vld [vmem:[%s5] sm:$0x1]
    %329 = vset.pattern.permute.xlu0 0
    %330 = vperm.xlu0 %329, %v311
    %v331 = vpop.permute.xlu0 %330
    %334 = vset.pattern.permute.xlu0 0
    %335 = vperm.xlu0 %334, %v312
    %v336 = vpop.permute.xlu0 %335
    %339 = vset.pattern.permute.xlu0 0
    %340 = vperm.xlu0 %339, %v313
    %v341 = vpop.permute.xlu0 %340
    %344 = vset.pattern.permute.xlu0 0
    %345 = vperm.xlu0 %344, %v314
    %v346 = vpop.permute.xlu0 %345
    %349 = vset.pattern.permute.xlu0 0
    %350 = vperm.xlu0 %349, %v315
    %v351 = vpop.permute.xlu0 %350
    %354 = vset.pattern.permute.xlu0 0
    %355 = vperm.xlu0 %354, %v316
    %v356 = vpop.permute.xlu0 %355
    %359 = vset.pattern.permute.xlu0 0
    %360 = vperm.xlu0 %359, %v317
    %v361 = vpop.permute.xlu0 %360
    %364 = vset.pattern.permute.xlu0 0
    %365 = vperm.xlu0 %364, %v318
    %v366 = vpop.permute.xlu0 %365
    %369 = vset.pattern.permute.xlu0 0
    %370 = vperm.xlu0 %369, %v319
    %v371 = vpop.permute.xlu0 %370
    %374 = vset.pattern.permute.xlu0 0
    %375 = vperm.xlu0 %374, %v320
    %v376 = vpop.permute.xlu0 %375
    %379 = vset.pattern.permute.xlu0 0
    %380 = vperm.xlu0 %379, %v321
    %v381 = vpop.permute.xlu0 %380
    %384 = vset.pattern.permute.xlu0 0
    %385 = vperm.xlu0 %384, %v322
    %v386 = vpop.permute.xlu0 %385
    %389 = vset.pattern.permute.xlu0 0
    %390 = vperm.xlu0 %389, %v323
    %v391 = vpop.permute.xlu0 %390
    %394 = vset.pattern.permute.xlu0 0
    %395 = vperm.xlu0 %394, %v324
    %v396 = vpop.permute.xlu0 %395
    %399 = vset.pattern.permute.xlu0 0
    %400 = vperm.xlu0 %399, %v325
    %v401 = vpop.permute.xlu0 %400
    %404 = vset.pattern.permute.xlu0 0
    %405 = vperm.xlu0 %404, %v326
    %v406 = vpop.permute.xlu0 %405
    %v409 = vperm.slane %v327, 0
    %v411 = vmul.f32 %v331, %v409
    %v412 = vmul.f32 %v336, %v409
    %v413 = vmul.f32 %v341, %v409
    %v414 = vmul.f32 %v346, %v409
    %v415 = vmul.f32 %v351, %v409
    %v416 = vmul.f32 %v356, %v409
    %v417 = vmul.f32 %v361, %v409
    %v418 = vmul.f32 %v366, %v409
    %v419 = vmul.f32 %v371, %v409
    %v420 = vmul.f32 %v376, %v409
    %v421 = vmul.f32 %v381, %v409
    %v422 = vmul.f32 %v386, %v409
    %v423 = vmul.f32 %v391, %v409
    %v424 = vmul.f32 %v396, %v409
    %v425 = vmul.f32 %v401, %v409
    %v426 = vmul.f32 %v406, %v409
    %v427 = vadd.f32 %v264, %v411
    %v428 = vadd.f32 %v267, %v412
    %v429 = vadd.f32 %v270, %v413
    %v430 = vadd.f32 %v273, %v414
    %v431 = vadd.f32 %v276, %v415
    %v432 = vadd.f32 %v279, %v416
    %v433 = vadd.f32 %v282, %v417
    %v434 = vadd.f32 %v285, %v418
    %v435 = vadd.f32 %v288, %v419
    %v436 = vadd.f32 %v291, %v420
    %v437 = vadd.f32 %v294, %v421
    %v438 = vadd.f32 %v297, %v422
    %v439 = vadd.f32 %v300, %v423
    %v440 = vadd.f32 %v303, %v424
    %v441 = vadd.f32 %v306, %v425
    %v442 = vadd.f32 %v309, %v426
    %v443 = vld [vmem:[%s6] sm:$0x1]
    %v445 = vperm.slane %v443, 0
    %v447 = vadd.f32 %v427, %v445
    %v448 = vadd.f32 %v428, %v445
    %v449 = vadd.f32 %v429, %v445
    %v450 = vadd.f32 %v430, %v445
    %v451 = vadd.f32 %v431, %v445
    %v452 = vadd.f32 %v432, %v445
    %v453 = vadd.f32 %v433, %v445
    %v454 = vadd.f32 %v434, %v445
    %v455 = vadd.f32 %v435, %v445
    %v456 = vadd.f32 %v436, %v445
    %v457 = vadd.f32 %v437, %v445
    %v458 = vadd.f32 %v438, %v445
    %v459 = vadd.f32 %v439, %v445
    %v460 = vadd.f32 %v440, %v445
    %v461 = vadd.f32 %v441, %v445
    %v462 = vadd.f32 %v442, %v445
    %v463 = vlaneseq
    %v464 = vand.u32 %v463, 127
    %vm465 = vcmp.ge.s32.totalorder %v464, 64
    %vm466 = vcmp.lt.s32.totalorder %v464, 96
    %vm467 = vmand %vm465, %vm466
    %v468 = vld [vmem:[#allocation2] sm:$0xff]
    %v469 = vld [vmem:[%s7] sm:$0xff]
    %v470 = vld [vmem:[%s7 + $0x8] sm:$0xff]
    %v471 = vld [vmem:[%s7 + $0x10] sm:$0xff]
    %v472 = vld [vmem:[%s7 + $0x18] sm:$0xff]
    %vm473 = vcmask 261120
    %v475 = vsel %vm473, %v468, 0
    %477 = vmatpush.msra.mxu0 0.0
    %478 = vmatpush.msra.mxu0 0.0
    %479 = vmatpush.msra.mxu0 0.0
    %480 = vmatpush.msra.mxu0 0.0
    %481 = vmatpush.msra.mxu0 0.0
    %482 = vmatpush.msra.mxu0 0.0
    %483 = vmatpush.msra.mxu0 0.0
    %484 = vmatpush.msra.mxu0 0.0
    %485 = vmatpush.msra.mxu0 0.0
    %486 = vmatpush.msra.mxu0 0.0
    %487 = vmatpush.msra.mxu0 0.0
    %488 = vmatpush.msra.mxu0 0.0
    %489 = vmatpush.msra.mxu0 %v472
    %490 = vmatpush.msra.mxu0 %v471
    %491 = vmatpush.msra.mxu0 %v470
    %492 = vmatpush.msra.mxu0 %v469
    %493 = vmatmul.f32.gmra.mxu0 %v475
    %v494 = vpop.f32.mrf.mxu0
    %v495 = vadd.f32 0.0, %v494
    %496 = vdwg.mxu0
    %v497 = vadd.f32 %v447, %v495
    %v498 = vtanh.pop %v497
    %v499 = vxor.u32 %v497, 2147483648
    %v500 = vmul.f32 %v499, 1.442695
    %v501 = vpow.pop %v500
    %v502 = vadd.f32 %v501, 1.0
    %v503 = vrcp.pop %v502
    %v504 = vmul.f32 %v502, %v503
    %v505 = vsub.f32 1.0, %v504
    %v506 = vmul.f32 %v503, %v505
    %v507 = vadd.f32 %v503, %v506
    %vm508 = vweird.f32 %v502
    %vm509 = vweird.f32 %v503
    %vm510 = vmor %vm508, %vm509
    %v511 = vsel %vm510, %v503, %v507
    %v512 = vand.u32 2147483647, %v502
    %vm513 = vcmp.eq.f32.partialorder %v512, 8.507059e+37
    %v514 = vand.u32 %v502, 2147483648
    %v515 = vor.u32 1.1754944e-38, %v514
    %v516 = vsel %vm513, %v515, %v511
    %v517 = vmul.f32 1.0, %v516
    %v518 = vsel %vm467, %v498, %v517
    %v519 = vld [vmem:[#allocation3] sm:$0xff]
    %v520 = vmul.f32 %v518, %v519
    %522 = vrot.lane.b32.xlu0 %v518, 96
    %v523 = vpop.permute.xlu0 %522
    %v525 = vmul.f32 %v518, %v523
    %527 = vrot.lane.b32.xlu0 %v525, 96
    %v528 = vpop.permute.xlu0 %527
    %v530 = vadd.f32 %v520, %v528
    %v531 = vtanh.pop %v530
    %533 = vrot.lane.b32.xlu0 %v531, 96
    %v534 = vpop.permute.xlu0 %533
    %v536 = vmul.f32 %v518, %v534
    %538 = vrot.lane.b32.xlu0 %v536, 32
    %v539 = vpop.permute.xlu0 %538
    %541 = vst.msk [vmem:[#allocation2] sm:$0xff] %vm473, %v539
    %542 = vst.msk [vmem:[#allocation3] sm:$0xff] %vm473, %v530
    %543 = vst.msk [vmem:[#allocation4] sm:$0xff] %vm473, %v539
    %544 = vst.msk [vmem:[#allocation6] sm:$0xff] %vm473, %v530
    %v545 = vld [vmem:[#allocation2] sm:$0xff]
    %v546 = vld [vmem:[%s7] sm:$0xff]
    %v547 = vld [vmem:[%s7 + $0x8] sm:$0xff]
    %v548 = vld [vmem:[%s7 + $0x10] sm:$0xff]
    %v549 = vld [vmem:[%s7 + $0x18] sm:$0xff]
    %v551 = vsel %vm473, %v545, 0
    %553 = vmatpush.msra.mxu0 0.0
    %554 = vmatpush.msra.mxu0 0.0
    %555 = vmatpush.msra.mxu0 0.0
    %556 = vmatpush.msra.mxu0 0.0
    %557 = vmatpush.msra.mxu0 0.0
    %558 = vmatpush.msra.mxu0 0.0
    %559 = vmatpush.msra.mxu0 0.0
    %560 = vmatpush.msra.mxu0 0.0
    %561 = vmatpush.msra.mxu0 0.0
    %562 = vmatpush.msra.mxu0 0.0
    %563 = vmatpush.msra.mxu0 0.0
    %564 = vmatpush.msra.mxu0 0.0
    %565 = vmatpush.msra.mxu0 %v549
    %566 = vmatpush.msra.mxu0 %v548
    %567 = vmatpush.msra.mxu0 %v547
    %568 = vmatpush.msra.mxu0 %v546
    %569 = vmatmul.f32.gmra.mxu0 %v551
    %v570 = vpop.f32.mrf.mxu0
    %v571 = vadd.f32 0.0, %v570
    %572 = vdwg.mxu0
    %v573 = vadd.f32 %v448, %v571
    %v574 = vtanh.pop %v573
    %v575 = vxor.u32 %v573, 2147483648
    %v576 = vmul.f32 %v575, 1.442695
    %v577 = vpow.pop %v576
    %v578 = vadd.f32 %v577, 1.0
    %v579 = vrcp.pop %v578
    %v580 = vmul.f32 %v578, %v579
    %v581 = vsub.f32 1.0, %v580
    %v582 = vmul.f32 %v579, %v581
    %v583 = vadd.f32 %v579, %v582
    %vm584 = vweird.f32 %v578
    %vm585 = vweird.f32 %v579
    %vm586 = vmor %vm584, %vm585
    %v587 = vsel %vm586, %v579, %v583
    %v588 = vand.u32 2147483647, %v578
    %vm589 = vcmp.eq.f32.partialorder %v588, 8.507059e+37
    %v590 = vand.u32 %v578, 2147483648
    %v591 = vor.u32 1.1754944e-38, %v590
    %v592 = vsel %vm589, %v591, %v587
    %v593 = vmul.f32 1.0, %v592
    %v594 = vsel %vm467, %v574, %v593
    %v595 = vld [vmem:[#allocation3] sm:$0xff]
    %v596 = vmul.f32 %v594, %v595
    %598 = vrot.lane.b32.xlu0 %v594, 96
    %v599 = vpop.permute.xlu0 %598
    %v601 = vmul.f32 %v594, %v599
    %603 = vrot.lane.b32.xlu0 %v601, 96
    %v604 = vpop.permute.xlu0 %603
    %v606 = vadd.f32 %v596, %v604
    %v607 = vtanh.pop %v606
    %609 = vrot.lane.b32.xlu0 %v607, 96
    %v610 = vpop.permute.xlu0 %609
    %v612 = vmul.f32 %v594, %v610
    %614 = vrot.lane.b32.xlu0 %v612, 32
    %v615 = vpop.permute.xlu0 %614
    %617 = vst.msk [vmem:[#allocation2] sm:$0xff] %vm473, %v615
    %618 = vst.msk [vmem:[#allocation3] sm:$0xff] %vm473, %v606
    %619 = vst.msk [vmem:[#allocation4 + $0x8] sm:$0xff] %vm473, %v615
    %620 = vst.msk [vmem:[#allocation6 + $0x8] sm:$0xff] %vm473, %v606
    %v621 = vld [vmem:[#allocation2] sm:$0xff]
    %v622 = vld [vmem:[%s7] sm:$0xff]
    %v623 = vld [vmem:[%s7 + $0x8] sm:$0xff]
    %v624 = vld [vmem:[%s7 + $0x10] sm:$0xff]
    %v625 = vld [vmem:[%s7 + $0x18] sm:$0xff]
    %v627 = vsel %vm473, %v621, 0
    %629 = vmatpush.msra.mxu0 0.0
    %630 = vmatpush.msra.mxu0 0.0
    %631 = vmatpush.msra.mxu0 0.0
    %632 = vmatpush.msra.mxu0 0.0
    %633 = vmatpush.msra.mxu0 0.0
    %634 = vmatpush.msra.mxu0 0.0
    %635 = vmatpush.msra.mxu0 0.0
    %636 = vmatpush.msra.mxu0 0.0
    %637 = vmatpush.msra.mxu0 0.0
    %638 = vmatpush.msra.mxu0 0.0
    %639 = vmatpush.msra.mxu0 0.0
    %640 = vmatpush.msra.mxu0 0.0
    %641 = vmatpush.msra.mxu0 %v625
    %642 = vmatpush.msra.mxu0 %v624
    %643 = vmatpush.msra.mxu0 %v623
    %644 = vmatpush.msra.mxu0 %v622
    %645 = vmatmul.f32.gmra.mxu0 %v627
    %v646 = vpop.f32.mrf.mxu0
    %v647 = vadd.f32 0.0, %v646
    %648 = vdwg.mxu0
    %v649 = vadd.f32 %v449, %v647
    %v650 = vtanh.pop %v649
    %v651 = vxor.u32 %v649, 2147483648
    %v652 = vmul.f32 %v651, 1.442695
    %v653 = vpow.pop %v652
    %v654 = vadd.f32 %v653, 1.0
    %v655 = vrcp.pop %v654
    %v656 = vmul.f32 %v654, %v655
    %v657 = vsub.f32 1.0, %v656
    %v658 = vmul.f32 %v655, %v657
    %v659 = vadd.f32 %v655, %v658
    %vm660 = vweird.f32 %v654
    %vm661 = vweird.f32 %v655
    %vm662 = vmor %vm660, %vm661
    %v663 = vsel %vm662, %v655, %v659
    %v664 = vand.u32 2147483647, %v654
    %vm665 = vcmp.eq.f32.partialorder %v664, 8.507059e+37
    %v666 = vand.u32 %v654, 2147483648
    %v667 = vor.u32 1.1754944e-38, %v666
    %v668 = vsel %vm665, %v667, %v663
    %v669 = vmul.f32 1.0, %v668
    %v670 = vsel %vm467, %v650, %v669
    %v671 = vld [vmem:[#allocation3] sm:$0xff]
    %v672 = vmul.f32 %v670, %v671
    %674 = vrot.lane.b32.xlu0 %v670, 96
    %v675 = vpop.permute.xlu0 %674
    %v677 = vmul.f32 %v670, %v675
    %679 = vrot.lane.b32.xlu0 %v677, 96
    %v680 = vpop.permute.xlu0 %679
    %v682 = vadd.f32 %v672, %v680
    %v683 = vtanh.pop %v682
    %685 = vrot.lane.b32.xlu0 %v683, 96
    %v686 = vpop.permute.xlu0 %685
    %v688 = vmul.f32 %v670, %v686
    %690 = vrot.lane.b32.xlu0 %v688, 32
    %v691 = vpop.permute.xlu0 %690
    %693 = vst.msk [vmem:[#allocation2] sm:$0xff] %vm473, %v691
    %694 = vst.msk [vmem:[#allocation3] sm:$0xff] %vm473, %v682
    %695 = vst.msk [vmem:[#allocation4 + $0x10] sm:$0xff] %vm473, %v691
    %696 = vst.msk [vmem:[#allocation6 + $0x10] sm:$0xff] %vm473, %v682
    %v697 = vld [vmem:[#allocation2] sm:$0xff]
    %v698 = vld [vmem:[%s7] sm:$0xff]
    %v699 = vld [vmem:[%s7 + $0x8] sm:$0xff]
    %v700 = vld [vmem:[%s7 + $0x10] sm:$0xff]
    %v701 = vld [vmem:[%s7 + $0x18] sm:$0xff]
    %v703 = vsel %vm473, %v697, 0
    %705 = vmatpush.msra.mxu0 0.0
    %706 = vmatpush.msra.mxu0 0.0
    %707 = vmatpush.msra.mxu0 0.0
    %708 = vmatpush.msra.mxu0 0.0
    %709 = vmatpush.msra.mxu0 0.0
    %710 = vmatpush.msra.mxu0 0.0
    %711 = vmatpush.msra.mxu0 0.0
    %712 = vmatpush.msra.mxu0 0.0
    %713 = vmatpush.msra.mxu0 0.0
    %714 = vmatpush.msra.mxu0 0.0
    %715 = vmatpush.msra.mxu0 0.0
    %716 = vmatpush.msra.mxu0 0.0
    %717 = vmatpush.msra.mxu0 %v701
    %718 = vmatpush.msra.mxu0 %v700
    %719 = vmatpush.msra.mxu0 %v699
    %720 = vmatpush.msra.mxu0 %v698
    %721 = vmatmul.f32.gmra.mxu0 %v703
    %v722 = vpop.f32.mrf.mxu0
    %v723 = vadd.f32 0.0, %v722
    %724 = vdwg.mxu0
    %v725 = vadd.f32 %v450, %v723
    %v726 = vtanh.pop %v725
    %v727 = vxor.u32 %v725, 2147483648
    %v728 = vmul.f32 %v727, 1.442695
    %v729 = vpow.pop %v728
    %v730 = vadd.f32 %v729, 1.0
    %v731 = vrcp.pop %v730
    %v732 = vmul.f32 %v730, %v731
    %v733 = vsub.f32 1.0, %v732
    %v734 = vmul.f32 %v731, %v733
    %v735 = vadd.f32 %v731, %v734
    %vm736 = vweird.f32 %v730
    %vm737 = vweird.f32 %v731
    %vm738 = vmor %vm736, %vm737
    %v739 = vsel %vm738, %v731, %v735
    %v740 = vand.u32 2147483647, %v730
    %vm741 = vcmp.eq.f32.partialorder %v740, 8.507059e+37
    %v742 = vand.u32 %v730, 2147483648
    %v743 = vor.u32 1.1754944e-38, %v742
    %v744 = vsel %vm741, %v743, %v739
    %v745 = vmul.f32 1.0, %v744
    %v746 = vsel %vm467, %v726, %v745
    %v747 = vld [vmem:[#allocation3] sm:$0xff]
    %v748 = vmul.f32 %v746, %v747
    %750 = vrot.lane.b32.xlu0 %v746, 96
    %v751 = vpop.permute.xlu0 %750
    %v753 = vmul.f32 %v746, %v751
    %755 = vrot.lane.b32.xlu0 %v753, 96
    %v756 = vpop.permute.xlu0 %755
    %v758 = vadd.f32 %v748, %v756
    %v759 = vtanh.pop %v758
    %761 = vrot.lane.b32.xlu0 %v759, 96
    %v762 = vpop.permute.xlu0 %761
    %v764 = vmul.f32 %v746, %v762
    %766 = vrot.lane.b32.xlu0 %v764, 32
    %v767 = vpop.permute.xlu0 %766
    %769 = vst.msk [vmem:[#allocation2] sm:$0xff] %vm473, %v767
    %770 = vst.msk [vmem:[#allocation3] sm:$0xff] %vm473, %v758
    %771 = vst.msk [vmem:[#allocation4 + $0x18] sm:$0xff] %vm473, %v767
    %772 = vst.msk [vmem:[#allocation6 + $0x18] sm:$0xff] %vm473, %v758
    %v773 = vld [vmem:[#allocation2] sm:$0xff]
    %v774 = vld [vmem:[%s7] sm:$0xff]
    %v775 = vld [vmem:[%s7 + $0x8] sm:$0xff]
    %v776 = vld [vmem:[%s7 + $0x10] sm:$0xff]
    %v777 = vld [vmem:[%s7 + $0x18] sm:$0xff]
    %v779 = vsel %vm473, %v773, 0
    %781 = vmatpush.msra.mxu0 0.0
    %782 = vmatpush.msra.mxu0 0.0
    %783 = vmatpush.msra.mxu0 0.0
    %784 = vmatpush.msra.mxu0 0.0
    %785 = vmatpush.msra.mxu0 0.0
    %786 = vmatpush.msra.mxu0 0.0
    %787 = vmatpush.msra.mxu0 0.0
    %788 = vmatpush.msra.mxu0 0.0
    %789 = vmatpush.msra.mxu0 0.0
    %790 = vmatpush.msra.mxu0 0.0
    %791 = vmatpush.msra.mxu0 0.0
    %792 = vmatpush.msra.mxu0 0.0
    %793 = vmatpush.msra.mxu0 %v777
    %794 = vmatpush.msra.mxu0 %v776
    %795 = vmatpush.msra.mxu0 %v775
    %796 = vmatpush.msra.mxu0 %v774
    %797 = vmatmul.f32.gmra.mxu0 %v779
    %v798 = vpop.f32.mrf.mxu0
    %v799 = vadd.f32 0.0, %v798
    %800 = vdwg.mxu0
    %v801 = vadd.f32 %v451, %v799
    %v802 = vtanh.pop %v801
    %v803 = vxor.u32 %v801, 2147483648
    %v804 = vmul.f32 %v803, 1.442695
    %v805 = vpow.pop %v804
    %v806 = vadd.f32 %v805, 1.0
    %v807 = vrcp.pop %v806
    %v808 = vmul.f32 %v806, %v807
    %v809 = vsub.f32 1.0, %v808
    %v810 = vmul.f32 %v807, %v809
    %v811 = vadd.f32 %v807, %v810
    %vm812 = vweird.f32 %v806
    %vm813 = vweird.f32 %v807
    %vm814 = vmor %vm812, %vm813
    %v815 = vsel %vm814, %v807, %v811
    %v816 = vand.u32 2147483647, %v806
    %vm817 = vcmp.eq.f32.partialorder %v816, 8.507059e+37
    %v818 = vand.u32 %v806, 2147483648
    %v819 = vor.u32 1.1754944e-38, %v818
    %v820 = vsel %vm817, %v819, %v815
    %v821 = vmul.f32 1.0, %v820
    %v822 = vsel %vm467, %v802, %v821
    %v823 = vld [vmem:[#allocation3] sm:$0xff]
    %v824 = vmul.f32 %v822, %v823
    %826 = vrot.lane.b32.xlu0 %v822, 96
    %v827 = vpop.permute.xlu0 %826
    %v829 = vmul.f32 %v822, %v827
    %831 = vrot.lane.b32.xlu0 %v829, 96
    %v832 = vpop.permute.xlu0 %831
    %v834 = vadd.f32 %v824, %v832
    %v835 = vtanh.pop %v834
    %837 = vrot.lane.b32.xlu0 %v835, 96
    %v838 = vpop.permute.xlu0 %837
    %v840 = vmul.f32 %v822, %v838
    %842 = vrot.lane.b32.xlu0 %v840, 32
    %v843 = vpop.permute.xlu0 %842
    %845 = vst.msk [vmem:[#allocation2] sm:$0xff] %vm473, %v843
    %846 = vst.msk [vmem:[#allocation3] sm:$0xff] %vm473, %v834
    %847 = vst.msk [vmem:[#allocation4 + $0x20] sm:$0xff] %vm473, %v843
    %848 = vst.msk [vmem:[#allocation6 + $0x20] sm:$0xff] %vm473, %v834
    %v849 = vld [vmem:[#allocation2] sm:$0xff]
    %v850 = vld [vmem:[%s7] sm:$0xff]
    %v851 = vld [vmem:[%s7 + $0x8] sm:$0xff]
    %v852 = vld [vmem:[%s7 + $0x10] sm:$0xff]
    %v853 = vld [vmem:[%s7 + $0x18] sm:$0xff]
    %v855 = vsel %vm473, %v849, 0
    %857 = vmatpush.msra.mxu0 0.0
    %858 = vmatpush.msra.mxu0 0.0
    %859 = vmatpush.msra.mxu0 0.0
    %860 = vmatpush.msra.mxu0 0.0
    %861 = vmatpush.msra.mxu0 0.0
    %862 = vmatpush.msra.mxu0 0.0
    %863 = vmatpush.msra.mxu0 0.0
    %864 = vmatpush.msra.mxu0 0.0
    %865 = vmatpush.msra.mxu0 0.0
    %866 = vmatpush.msra.mxu0 0.0
    %867 = vmatpush.msra.mxu0 0.0
    %868 = vmatpush.msra.mxu0 0.0
    %869 = vmatpush.msra.mxu0 %v853
    %870 = vmatpush.msra.mxu0 %v852
    %871 = vmatpush.msra.mxu0 %v851
    %872 = vmatpush.msra.mxu0 %v850
    %873 = vmatmul.f32.gmra.mxu0 %v855
    %v874 = vpop.f32.mrf.mxu0
    %v875 = vadd.f32 0.0, %v874
    %876 = vdwg.mxu0
    %v877 = vadd.f32 %v452, %v875
    %v878 = vtanh.pop %v877
    %v879 = vxor.u32 %v877, 2147483648
    %v880 = vmul.f32 %v879, 1.442695
    %v881 = vpow.pop %v880
    %v882 = vadd.f32 %v881, 1.0
    %v883 = vrcp.pop %v882
    %v884 = vmul.f32 %v882, %v883
    %v885 = vsub.f32 1.0, %v884
    %v886 = vmul.f32 %v883, %v885
    %v887 = vadd.f32 %v883, %v886
    %vm888 = vweird.f32 %v882
    %vm889 = vweird.f32 %v883
    %vm890 = vmor %vm888, %vm889
    %v891 = vsel %vm890, %v883, %v887
    %v892 = vand.u32 2147483647, %v882
    %vm893 = vcmp.eq.f32.partialorder %v892, 8.507059e+37
    %v894 = vand.u32 %v882, 2147483648
    %v895 = vor.u32 1.1754944e-38, %v894
    %v896 = vsel %vm893, %v895, %v891
    %v897 = vmul.f32 1.0, %v896
    %v898 = vsel %vm467, %v878, %v897
    %v899 = vld [vmem:[#allocation3] sm:$0xff]
    %v900 = vmul.f32 %v898, %v899
    %902 = vrot.lane.b32.xlu0 %v898, 96
    %v903 = vpop.permute.xlu0 %902
    %v905 = vmul.f32 %v898, %v903
    %907 = vrot.lane.b32.xlu0 %v905, 96
    %v908 = vpop.permute.xlu0 %907
    %v910 = vadd.f32 %v900, %v908
    %v911 = vtanh.pop %v910
    %913 = vrot.lane.b32.xlu0 %v911, 96
    %v914 = vpop.permute.xlu0 %913
    %v916 = vmul.f32 %v898, %v914
    %918 = vrot.lane.b32.xlu0 %v916, 32
    %v919 = vpop.permute.xlu0 %918
    %921 = vst.msk [vmem:[#allocation2] sm:$0xff] %vm473, %v919
    %922 = vst.msk [vmem:[#allocation3] sm:$0xff] %vm473, %v910
    %923 = vst.msk [vmem:[#allocation4 + $0x28] sm:$0xff] %vm473, %v919
    %924 = vst.msk [vmem:[#allocation6 + $0x28] sm:$0xff] %vm473, %v910
    %v925 = vld [vmem:[#allocation2] sm:$0xff]
    %v926 = vld [vmem:[%s7] sm:$0xff]
    %v927 = vld [vmem:[%s7 + $0x8] sm:$0xff]
    %v928 = vld [vmem:[%s7 + $0x10] sm:$0xff]
    %v929 = vld [vmem:[%s7 + $0x18] sm:$0xff]
    %v931 = vsel %vm473, %v925, 0
    %933 = vmatpush.msra.mxu0 0.0
    %934 = vmatpush.msra.mxu0 0.0
    %935 = vmatpush.msra.mxu0 0.0
    %936 = vmatpush.msra.mxu0 0.0
    %937 = vmatpush.msra.mxu0 0.0
    %938 = vmatpush.msra.mxu0 0.0
    %939 = vmatpush.msra.mxu0 0.0
    %940 = vmatpush.msra.mxu0 0.0
    %941 = vmatpush.msra.mxu0 0.0
    %942 = vmatpush.msra.mxu0 0.0
    %943 = vmatpush.msra.mxu0 0.0
    %944 = vmatpush.msra.mxu0 0.0
    %945 = vmatpush.msra.mxu0 %v929
    %946 = vmatpush.msra.mxu0 %v928
    %947 = vmatpush.msra.mxu0 %v927
    %948 = vmatpush.msra.mxu0 %v926
    %949 = vmatmul.f32.gmra.mxu0 %v931
    %v950 = vpop.f32.mrf.mxu0
    %v951 = vadd.f32 0.0, %v950
    %952 = vdwg.mxu0
    %v953 = vadd.f32 %v453, %v951
    %v954 = vtanh.pop %v953
    %v955 = vxor.u32 %v953, 2147483648
    %v956 = vmul.f32 %v955, 1.442695
    %v957 = vpow.pop %v956
    %v958 = vadd.f32 %v957, 1.0
    %v959 = vrcp.pop %v958
    %v960 = vmul.f32 %v958, %v959
    %v961 = vsub.f32 1.0, %v960
    %v962 = vmul.f32 %v959, %v961
    %v963 = vadd.f32 %v959, %v962
    %vm964 = vweird.f32 %v958
    %vm965 = vweird.f32 %v959
    %vm966 = vmor %vm964, %vm965
    %v967 = vsel %vm966, %v959, %v963
    %v968 = vand.u32 2147483647, %v958
    %vm969 = vcmp.eq.f32.partialorder %v968, 8.507059e+37
    %v970 = vand.u32 %v958, 2147483648
    %v971 = vor.u32 1.1754944e-38, %v970
    %v972 = vsel %vm969, %v971, %v967
    %v973 = vmul.f32 1.0, %v972
    %v974 = vsel %vm467, %v954, %v973
    %v975 = vld [vmem:[#allocation3] sm:$0xff]
    %v976 = vmul.f32 %v974, %v975
    %978 = vrot.lane.b32.xlu0 %v974, 96
    %v979 = vpop.permute.xlu0 %978
    %v981 = vmul.f32 %v974, %v979
    %983 = vrot.lane.b32.xlu0 %v981, 96
    %v984 = vpop.permute.xlu0 %983
    %v986 = vadd.f32 %v976, %v984
    %v987 = vtanh.pop %v986
    %989 = vrot.lane.b32.xlu0 %v987, 96
    %v990 = vpop.permute.xlu0 %989
    %v992 = vmul.f32 %v974, %v990
    %994 = vrot.lane.b32.xlu0 %v992, 32
    %v995 = vpop.permute.xlu0 %994
    %997 = vst.msk [vmem:[#allocation2] sm:$0xff] %vm473, %v995
    %998 = vst.msk [vmem:[#allocation3] sm:$0xff] %vm473, %v986
    %999 = vst.msk [vmem:[#allocation4 + $0x30] sm:$0xff] %vm473, %v995
    %1000 = vst.msk [vmem:[#allocation6 + $0x30] sm:$0xff] %vm473, %v986
    %v1001 = vld [vmem:[#allocation2] sm:$0xff]
    %v1002 = vld [vmem:[%s7] sm:$0xff]
    %v1003 = vld [vmem:[%s7 + $0x8] sm:$0xff]
    %v1004 = vld [vmem:[%s7 + $0x10] sm:$0xff]
    %v1005 = vld [vmem:[%s7 + $0x18] sm:$0xff]
    %v1007 = vsel %vm473, %v1001, 0
    %1009 = vmatpush.msra.mxu0 0.0
    %1010 = vmatpush.msra.mxu0 0.0
    %1011 = vmatpush.msra.mxu0 0.0
    %1012 = vmatpush.msra.mxu0 0.0
    %1013 = vmatpush.msra.mxu0 0.0
    %1014 = vmatpush.msra.mxu0 0.0
    %1015 = vmatpush.msra.mxu0 0.0
    %1016 = vmatpush.msra.mxu0 0.0
    %1017 = vmatpush.msra.mxu0 0.0
    %1018 = vmatpush.msra.mxu0 0.0
    %1019 = vmatpush.msra.mxu0 0.0
    %1020 = vmatpush.msra.mxu0 0.0
    %1021 = vmatpush.msra.mxu0 %v1005
    %1022 = vmatpush.msra.mxu0 %v1004
    %1023 = vmatpush.msra.mxu0 %v1003
    %1024 = vmatpush.msra.mxu0 %v1002
    %1025 = vmatmul.f32.gmra.mxu0 %v1007
    %v1026 = vpop.f32.mrf.mxu0
    %v1027 = vadd.f32 0.0, %v1026
    %1028 = vdwg.mxu0
    %v1029 = vadd.f32 %v454, %v1027
    %v1030 = vtanh.pop %v1029
    %v1031 = vxor.u32 %v1029, 2147483648
    %v1032 = vmul.f32 %v1031, 1.442695
    %v1033 = vpow.pop %v1032
    %v1034 = vadd.f32 %v1033, 1.0
    %v1035 = vrcp.pop %v1034
    %v1036 = vmul.f32 %v1034, %v1035
    %v1037 = vsub.f32 1.0, %v1036
    %v1038 = vmul.f32 %v1035, %v1037
    %v1039 = vadd.f32 %v1035, %v1038
    %vm1040 = vweird.f32 %v1034
    %vm1041 = vweird.f32 %v1035
    %vm1042 = vmor %vm1040, %vm1041
    %v1043 = vsel %vm1042, %v1035, %v1039
    %v1044 = vand.u32 2147483647, %v1034
    %vm1045 = vcmp.eq.f32.partialorder %v1044, 8.507059e+37
    %v1046 = vand.u32 %v1034, 2147483648
    %v1047 = vor.u32 1.1754944e-38, %v1046
    %v1048 = vsel %vm1045, %v1047, %v1043
    %v1049 = vmul.f32 1.0, %v1048
    %v1050 = vsel %vm467, %v1030, %v1049
    %v1051 = vld [vmem:[#allocation3] sm:$0xff]
    %v1052 = vmul.f32 %v1050, %v1051
    %1054 = vrot.lane.b32.xlu0 %v1050, 96
    %v1055 = vpop.permute.xlu0 %1054
    %v1057 = vmul.f32 %v1050, %v1055
    %1059 = vrot.lane.b32.xlu0 %v1057, 96
    %v1060 = vpop.permute.xlu0 %1059
    %v1062 = vadd.f32 %v1052, %v1060
    %v1063 = vtanh.pop %v1062
    %1065 = vrot.lane.b32.xlu0 %v1063, 96
    %v1066 = vpop.permute.xlu0 %1065
    %v1068 = vmul.f32 %v1050, %v1066
    %1070 = vrot.lane.b32.xlu0 %v1068, 32
    %v1071 = vpop.permute.xlu0 %1070
    %1073 = vst.msk [vmem:[#allocation2] sm:$0xff] %vm473, %v1071
    %1074 = vst.msk [vmem:[#allocation3] sm:$0xff] %vm473, %v1062
    %1075 = vst.msk [vmem:[#allocation4 + $0x38] sm:$0xff] %vm473, %v1071
    %1076 = vst.msk [vmem:[#allocation6 + $0x38] sm:$0xff] %vm473, %v1062
    %v1077 = vld [vmem:[#allocation2] sm:$0xff]
    %v1078 = vld [vmem:[%s7] sm:$0xff]
    %v1079 = vld [vmem:[%s7 + $0x8] sm:$0xff]
    %v1080 = vld [vmem:[%s7 + $0x10] sm:$0xff]
    %v1081 = vld [vmem:[%s7 + $0x18] sm:$0xff]
    %v1083 = vsel %vm473, %v1077, 0
    %1085 = vmatpush.msra.mxu0 0.0
    %1086 = vmatpush.msra.mxu0 0.0
    %1087 = vmatpush.msra.mxu0 0.0
    %1088 = vmatpush.msra.mxu0 0.0
    %1089 = vmatpush.msra.mxu0 0.0
    %1090 = vmatpush.msra.mxu0 0.0
    %1091 = vmatpush.msra.mxu0 0.0
    %1092 = vmatpush.msra.mxu0 0.0
    %1093 = vmatpush.msra.mxu0 0.0
    %1094 = vmatpush.msra.mxu0 0.0
    %1095 = vmatpush.msra.mxu0 0.0
    %1096 = vmatpush.msra.mxu0 0.0
    %1097 = vmatpush.msra.mxu0 %v1081
    %1098 = vmatpush.msra.mxu0 %v1080
    %1099 = vmatpush.msra.mxu0 %v1079
    %1100 = vmatpush.msra.mxu0 %v1078
    %1101 = vmatmul.f32.gmra.mxu0 %v1083
    %v1102 = vpop.f32.mrf.mxu0
    %v1103 = vadd.f32 0.0, %v1102
    %1104 = vdwg.mxu0
    %v1105 = vadd.f32 %v455, %v1103
    %v1106 = vtanh.pop %v1105
    %v1107 = vxor.u32 %v1105, 2147483648
    %v1108 = vmul.f32 %v1107, 1.442695
    %v1109 = vpow.pop %v1108
    %v1110 = vadd.f32 %v1109, 1.0
    %v1111 = vrcp.pop %v1110
    %v1112 = vmul.f32 %v1110, %v1111
    %v1113 = vsub.f32 1.0, %v1112
    %v1114 = vmul.f32 %v1111, %v1113
    %v1115 = vadd.f32 %v1111, %v1114
    %vm1116 = vweird.f32 %v1110
    %vm1117 = vweird.f32 %v1111
    %vm1118 = vmor %vm1116, %vm1117
    %v1119 = vsel %vm1118, %v1111, %v1115
    %v1120 = vand.u32 2147483647, %v1110
    %vm1121 = vcmp.eq.f32.partialorder %v1120, 8.507059e+37
    %v1122 = vand.u32 %v1110, 2147483648
    %v1123 = vor.u32 1.1754944e-38, %v1122
    %v1124 = vsel %vm1121, %v1123, %v1119
    %v1125 = vmul.f32 1.0, %v1124
    %v1126 = vsel %vm467, %v1106, %v1125
    %v1127 = vld [vmem:[#allocation3] sm:$0xff]
    %v1128 = vmul.f32 %v1126, %v1127
    %1130 = vrot.lane.b32.xlu0 %v1126, 96
    %v1131 = vpop.permute.xlu0 %1130
    %v1133 = vmul.f32 %v1126, %v1131
    %1135 = vrot.lane.b32.xlu0 %v1133, 96
    %v1136 = vpop.permute.xlu0 %1135
    %v1138 = vadd.f32 %v1128, %v1136
    %v1139 = vtanh.pop %v1138
    %1141 = vrot.lane.b32.xlu0 %v1139, 96
    %v1142 = vpop.permute.xlu0 %1141
    %v1144 = vmul.f32 %v1126, %v1142
    %1146 = vrot.lane.b32.xlu0 %v1144, 32
    %v1147 = vpop.permute.xlu0 %1146
    %1149 = vst.msk [vmem:[#allocation2] sm:$0xff] %vm473, %v1147
    %1150 = vst.msk [vmem:[#allocation3] sm:$0xff] %vm473, %v1138
    %1151 = vst.msk [vmem:[#allocation4 + $0x40] sm:$0xff] %vm473, %v1147
    %1152 = vst.msk [vmem:[#allocation6 + $0x40] sm:$0xff] %vm473, %v1138
    %v1153 = vld [vmem:[#allocation2] sm:$0xff]
    %v1154 = vld [vmem:[%s7] sm:$0xff]
    %v1155 = vld [vmem:[%s7 + $0x8] sm:$0xff]
    %v1156 = vld [vmem:[%s7 + $0x10] sm:$0xff]
    %v1157 = vld [vmem:[%s7 + $0x18] sm:$0xff]
    %v1159 = vsel %vm473, %v1153, 0
    %1161 = vmatpush.msra.mxu0 0.0
    %1162 = vmatpush.msra.mxu0 0.0
    %1163 = vmatpush.msra.mxu0 0.0
    %1164 = vmatpush.msra.mxu0 0.0
    %1165 = vmatpush.msra.mxu0 0.0
    %1166 = vmatpush.msra.mxu0 0.0
    %1167 = vmatpush.msra.mxu0 0.0
    %1168 = vmatpush.msra.mxu0 0.0
    %1169 = vmatpush.msra.mxu0 0.0
    %1170 = vmatpush.msra.mxu0 0.0
    %1171 = vmatpush.msra.mxu0 0.0
    %1172 = vmatpush.msra.mxu0 0.0
    %1173 = vmatpush.msra.mxu0 %v1157
    %1174 = vmatpush.msra.mxu0 %v1156
    %1175 = vmatpush.msra.mxu0 %v1155
    %1176 = vmatpush.msra.mxu0 %v1154
    %1177 = vmatmul.f32.gmra.mxu0 %v1159
    %v1178 = vpop.f32.mrf.mxu0
    %v1179 = vadd.f32 0.0, %v1178
    %1180 = vdwg.mxu0
    %v1181 = vadd.f32 %v456, %v1179
    %v1182 = vtanh.pop %v1181
    %v1183 = vxor.u32 %v1181, 2147483648
    %v1184 = vmul.f32 %v1183, 1.442695
    %v1185 = vpow.pop %v1184
    %v1186 = vadd.f32 %v1185, 1.0
    %v1187 = vrcp.pop %v1186
    %v1188 = vmul.f32 %v1186, %v1187
    %v1189 = vsub.f32 1.0, %v1188
    %v1190 = vmul.f32 %v1187, %v1189
    %v1191 = vadd.f32 %v1187, %v1190
    %vm1192 = vweird.f32 %v1186
    %vm1193 = vweird.f32 %v1187
    %vm1194 = vmor %vm1192, %vm1193
    %v1195 = vsel %vm1194, %v1187, %v1191
    %v1196 = vand.u32 2147483647, %v1186
    %vm1197 = vcmp.eq.f32.partialorder %v1196, 8.507059e+37
    %v1198 = vand.u32 %v1186, 2147483648
    %v1199 = vor.u32 1.1754944e-38, %v1198
    %v1200 = vsel %vm1197, %v1199, %v1195
    %v1201 = vmul.f32 1.0, %v1200
    %v1202 = vsel %vm467, %v1182, %v1201
    %v1203 = vld [vmem:[#allocation3] sm:$0xff]
    %v1204 = vmul.f32 %v1202, %v1203
    %1206 = vrot.lane.b32.xlu0 %v1202, 96
    %v1207 = vpop.permute.xlu0 %1206
    %v1209 = vmul.f32 %v1202, %v1207
    %1211 = vrot.lane.b32.xlu0 %v1209, 96
    %v1212 = vpop.permute.xlu0 %1211
    %v1214 = vadd.f32 %v1204, %v1212
    %v1215 = vtanh.pop %v1214
    %1217 = vrot.lane.b32.xlu0 %v1215, 96
    %v1218 = vpop.permute.xlu0 %1217
    %v1220 = vmul.f32 %v1202, %v1218
    %1222 = vrot.lane.b32.xlu0 %v1220, 32
    %v1223 = vpop.permute.xlu0 %1222
    %1225 = vst.msk [vmem:[#allocation2] sm:$0xff] %vm473, %v1223
    %1226 = vst.msk [vmem:[#allocation3] sm:$0xff] %vm473, %v1214
    %1227 = vst.msk [vmem:[#allocation4 + $0x48] sm:$0xff] %vm473, %v1223
    %1228 = vst.msk [vmem:[#allocation6 + $0x48] sm:$0xff] %vm473, %v1214
    %v1229 = vld [vmem:[#allocation2] sm:$0xff]
    %v1230 = vld [vmem:[%s7] sm:$0xff]
    %v1231 = vld [vmem:[%s7 + $0x8] sm:$0xff]
    %v1232 = vld [vmem:[%s7 + $0x10] sm:$0xff]
    %v1233 = vld [vmem:[%s7 + $0x18] sm:$0xff]
    %v1235 = vsel %vm473, %v1229, 0
    %1237 = vmatpush.msra.mxu0 0.0
    %1238 = vmatpush.msra.mxu0 0.0
    %1239 = vmatpush.msra.mxu0 0.0
    %1240 = vmatpush.msra.mxu0 0.0
    %1241 = vmatpush.msra.mxu0 0.0
    %1242 = vmatpush.msra.mxu0 0.0
    %1243 = vmatpush.msra.mxu0 0.0
    %1244 = vmatpush.msra.mxu0 0.0
    %1245 = vmatpush.msra.mxu0 0.0
    %1246 = vmatpush.msra.mxu0 0.0
    %1247 = vmatpush.msra.mxu0 0.0
    %1248 = vmatpush.msra.mxu0 0.0
    %1249 = vmatpush.msra.mxu0 %v1233
    %1250 = vmatpush.msra.mxu0 %v1232
    %1251 = vmatpush.msra.mxu0 %v1231
    %1252 = vmatpush.msra.mxu0 %v1230
    %1253 = vmatmul.f32.gmra.mxu0 %v1235
    %v1254 = vpop.f32.mrf.mxu0
    %v1255 = vadd.f32 0.0, %v1254
    %1256 = vdwg.mxu0
    %v1257 = vadd.f32 %v457, %v1255
    %v1258 = vtanh.pop %v1257
    %v1259 = vxor.u32 %v1257, 2147483648
    %v1260 = vmul.f32 %v1259, 1.442695
    %v1261 = vpow.pop %v1260
    %v1262 = vadd.f32 %v1261, 1.0
    %v1263 = vrcp.pop %v1262
    %v1264 = vmul.f32 %v1262, %v1263
    %v1265 = vsub.f32 1.0, %v1264
    %v1266 = vmul.f32 %v1263, %v1265
    %v1267 = vadd.f32 %v1263, %v1266
    %vm1268 = vweird.f32 %v1262
    %vm1269 = vweird.f32 %v1263
    %vm1270 = vmor %vm1268, %vm1269
    %v1271 = vsel %vm1270, %v1263, %v1267
    %v1272 = vand.u32 2147483647, %v1262
    %vm1273 = vcmp.eq.f32.partialorder %v1272, 8.507059e+37
    %v1274 = vand.u32 %v1262, 2147483648
    %v1275 = vor.u32 1.1754944e-38, %v1274
    %v1276 = vsel %vm1273, %v1275, %v1271
    %v1277 = vmul.f32 1.0, %v1276
    %v1278 = vsel %vm467, %v1258, %v1277
    %v1279 = vld [vmem:[#allocation3] sm:$0xff]
    %v1280 = vmul.f32 %v1278, %v1279
    %1282 = vrot.lane.b32.xlu0 %v1278, 96
    %v1283 = vpop.permute.xlu0 %1282
    %v1285 = vmul.f32 %v1278, %v1283
    %1287 = vrot.lane.b32.xlu0 %v1285, 96
    %v1288 = vpop.permute.xlu0 %1287
    %v1290 = vadd.f32 %v1280, %v1288
    %v1291 = vtanh.pop %v1290
    %1293 = vrot.lane.b32.xlu0 %v1291, 96
    %v1294 = vpop.permute.xlu0 %1293
    %v1296 = vmul.f32 %v1278, %v1294
    %1298 = vrot.lane.b32.xlu0 %v1296, 32
    %v1299 = vpop.permute.xlu0 %1298
    %1301 = vst.msk [vmem:[#allocation2] sm:$0xff] %vm473, %v1299
    %1302 = vst.msk [vmem:[#allocation3] sm:$0xff] %vm473, %v1290
    %1303 = vst.msk [vmem:[#allocation4 + $0x50] sm:$0xff] %vm473, %v1299
    %1304 = vst.msk [vmem:[#allocation6 + $0x50] sm:$0xff] %vm473, %v1290
    %v1305 = vld [vmem:[#allocation2] sm:$0xff]
    %v1306 = vld [vmem:[%s7] sm:$0xff]
    %v1307 = vld [vmem:[%s7 + $0x8] sm:$0xff]
    %v1308 = vld [vmem:[%s7 + $0x10] sm:$0xff]
    %v1309 = vld [vmem:[%s7 + $0x18] sm:$0xff]
    %v1311 = vsel %vm473, %v1305, 0
    %1313 = vmatpush.msra.mxu0 0.0
    %1314 = vmatpush.msra.mxu0 0.0
    %1315 = vmatpush.msra.mxu0 0.0
    %1316 = vmatpush.msra.mxu0 0.0
    %1317 = vmatpush.msra.mxu0 0.0
    %1318 = vmatpush.msra.mxu0 0.0
    %1319 = vmatpush.msra.mxu0 0.0
    %1320 = vmatpush.msra.mxu0 0.0
    %1321 = vmatpush.msra.mxu0 0.0
    %1322 = vmatpush.msra.mxu0 0.0
    %1323 = vmatpush.msra.mxu0 0.0
    %1324 = vmatpush.msra.mxu0 0.0
    %1325 = vmatpush.msra.mxu0 %v1309
    %1326 = vmatpush.msra.mxu0 %v1308
    %1327 = vmatpush.msra.mxu0 %v1307
    %1328 = vmatpush.msra.mxu0 %v1306
    %1329 = vmatmul.f32.gmra.mxu0 %v1311
    %v1330 = vpop.f32.mrf.mxu0
    %v1331 = vadd.f32 0.0, %v1330
    %1332 = vdwg.mxu0
    %v1333 = vadd.f32 %v458, %v1331
    %v1334 = vtanh.pop %v1333
    %v1335 = vxor.u32 %v1333, 2147483648
    %v1336 = vmul.f32 %v1335, 1.442695
    %v1337 = vpow.pop %v1336
    %v1338 = vadd.f32 %v1337, 1.0
    %v1339 = vrcp.pop %v1338
    %v1340 = vmul.f32 %v1338, %v1339
    %v1341 = vsub.f32 1.0, %v1340
    %v1342 = vmul.f32 %v1339, %v1341
    %v1343 = vadd.f32 %v1339, %v1342
    %vm1344 = vweird.f32 %v1338
    %vm1345 = vweird.f32 %v1339
    %vm1346 = vmor %vm1344, %vm1345
    %v1347 = vsel %vm1346, %v1339, %v1343
    %v1348 = vand.u32 2147483647, %v1338
    %vm1349 = vcmp.eq.f32.partialorder %v1348, 8.507059e+37
    %v1350 = vand.u32 %v1338, 2147483648
    %v1351 = vor.u32 1.1754944e-38, %v1350
    %v1352 = vsel %vm1349, %v1351, %v1347
    %v1353 = vmul.f32 1.0, %v1352
    %v1354 = vsel %vm467, %v1334, %v1353
    %v1355 = vld [vmem:[#allocation3] sm:$0xff]
    %v1356 = vmul.f32 %v1354, %v1355
    %1358 = vrot.lane.b32.xlu0 %v1354, 96
    %v1359 = vpop.permute.xlu0 %1358
    %v1361 = vmul.f32 %v1354, %v1359
    %1363 = vrot.lane.b32.xlu0 %v1361, 96
    %v1364 = vpop.permute.xlu0 %1363
    %v1366 = vadd.f32 %v1356, %v1364
    %v1367 = vtanh.pop %v1366
    %1369 = vrot.lane.b32.xlu0 %v1367, 96
    %v1370 = vpop.permute.xlu0 %1369
    %v1372 = vmul.f32 %v1354, %v1370
    %1374 = vrot.lane.b32.xlu0 %v1372, 32
    %v1375 = vpop.permute.xlu0 %1374
    %1377 = vst.msk [vmem:[#allocation2] sm:$0xff] %vm473, %v1375
    %1378 = vst.msk [vmem:[#allocation3] sm:$0xff] %vm473, %v1366
    %1379 = vst.msk [vmem:[#allocation4 + $0x58] sm:$0xff] %vm473, %v1375
    %1380 = vst.msk [vmem:[#allocation6 + $0x58] sm:$0xff] %vm473, %v1366
    %v1381 = vld [vmem:[#allocation2] sm:$0xff]
    %v1382 = vld [vmem:[%s7] sm:$0xff]
    %v1383 = vld [vmem:[%s7 + $0x8] sm:$0xff]
    %v1384 = vld [vmem:[%s7 + $0x10] sm:$0xff]
    %v1385 = vld [vmem:[%s7 + $0x18] sm:$0xff]
    %v1387 = vsel %vm473, %v1381, 0
    %1389 = vmatpush.msra.mxu0 0.0
    %1390 = vmatpush.msra.mxu0 0.0
    %1391 = vmatpush.msra.mxu0 0.0
    %1392 = vmatpush.msra.mxu0 0.0
    %1393 = vmatpush.msra.mxu0 0.0
    %1394 = vmatpush.msra.mxu0 0.0
    %1395 = vmatpush.msra.mxu0 0.0
    %1396 = vmatpush.msra.mxu0 0.0
    %1397 = vmatpush.msra.mxu0 0.0
    %1398 = vmatpush.msra.mxu0 0.0
    %1399 = vmatpush.msra.mxu0 0.0
    %1400 = vmatpush.msra.mxu0 0.0
    %1401 = vmatpush.msra.mxu0 %v1385
    %1402 = vmatpush.msra.mxu0 %v1384
    %1403 = vmatpush.msra.mxu0 %v1383
    %1404 = vmatpush.msra.mxu0 %v1382
    %1405 = vmatmul.f32.gmra.mxu0 %v1387
    %v1406 = vpop.f32.mrf.mxu0
    %v1407 = vadd.f32 0.0, %v1406
    %1408 = vdwg.mxu0
    %v1409 = vadd.f32 %v459, %v1407
    %v1410 = vtanh.pop %v1409
    %v1411 = vxor.u32 %v1409, 2147483648
    %v1412 = vmul.f32 %v1411, 1.442695
    %v1413 = vpow.pop %v1412
    %v1414 = vadd.f32 %v1413, 1.0
    %v1415 = vrcp.pop %v1414
    %v1416 = vmul.f32 %v1414, %v1415
    %v1417 = vsub.f32 1.0, %v1416
    %v1418 = vmul.f32 %v1415, %v1417
    %v1419 = vadd.f32 %v1415, %v1418
    %vm1420 = vweird.f32 %v1414
    %vm1421 = vweird.f32 %v1415
    %vm1422 = vmor %vm1420, %vm1421
    %v1423 = vsel %vm1422, %v1415, %v1419
    %v1424 = vand.u32 2147483647, %v1414
    %vm1425 = vcmp.eq.f32.partialorder %v1424, 8.507059e+37
    %v1426 = vand.u32 %v1414, 2147483648
    %v1427 = vor.u32 1.1754944e-38, %v1426
    %v1428 = vsel %vm1425, %v1427, %v1423
    %v1429 = vmul.f32 1.0, %v1428
    %v1430 = vsel %vm467, %v1410, %v1429
    %v1431 = vld [vmem:[#allocation3] sm:$0xff]
    %v1432 = vmul.f32 %v1430, %v1431
    %1434 = vrot.lane.b32.xlu0 %v1430, 96
    %v1435 = vpop.permute.xlu0 %1434
    %v1437 = vmul.f32 %v1430, %v1435
    %1439 = vrot.lane.b32.xlu0 %v1437, 96
    %v1440 = vpop.permute.xlu0 %1439
    %v1442 = vadd.f32 %v1432, %v1440
    %v1443 = vtanh.pop %v1442
    %1445 = vrot.lane.b32.xlu0 %v1443, 96
    %v1446 = vpop.permute.xlu0 %1445
    %v1448 = vmul.f32 %v1430, %v1446
    %1450 = vrot.lane.b32.xlu0 %v1448, 32
    %v1451 = vpop.permute.xlu0 %1450
    %1453 = vst.msk [vmem:[#allocation2] sm:$0xff] %vm473, %v1451
    %1454 = vst.msk [vmem:[#allocation3] sm:$0xff] %vm473, %v1442
    %1455 = vst.msk [vmem:[#allocation4 + $0x60] sm:$0xff] %vm473, %v1451
    %1456 = vst.msk [vmem:[#allocation6 + $0x60] sm:$0xff] %vm473, %v1442
    %v1457 = vld [vmem:[#allocation2] sm:$0xff]
    %v1458 = vld [vmem:[%s7] sm:$0xff]
    %v1459 = vld [vmem:[%s7 + $0x8] sm:$0xff]
    %v1460 = vld [vmem:[%s7 + $0x10] sm:$0xff]
    %v1461 = vld [vmem:[%s7 + $0x18] sm:$0xff]
    %v1463 = vsel %vm473, %v1457, 0
    %1465 = vmatpush.msra.mxu0 0.0
    %1466 = vmatpush.msra.mxu0 0.0
    %1467 = vmatpush.msra.mxu0 0.0
    %1468 = vmatpush.msra.mxu0 0.0
    %1469 = vmatpush.msra.mxu0 0.0
    %1470 = vmatpush.msra.mxu0 0.0
    %1471 = vmatpush.msra.mxu0 0.0
    %1472 = vmatpush.msra.mxu0 0.0
    %1473 = vmatpush.msra.mxu0 0.0
    %1474 = vmatpush.msra.mxu0 0.0
    %1475 = vmatpush.msra.mxu0 0.0
    %1476 = vmatpush.msra.mxu0 0.0
    %1477 = vmatpush.msra.mxu0 %v1461
    %1478 = vmatpush.msra.mxu0 %v1460
    %1479 = vmatpush.msra.mxu0 %v1459
    %1480 = vmatpush.msra.mxu0 %v1458
    %1481 = vmatmul.f32.gmra.mxu0 %v1463
    %v1482 = vpop.f32.mrf.mxu0
    %v1483 = vadd.f32 0.0, %v1482
    %1484 = vdwg.mxu0
    %v1485 = vadd.f32 %v460, %v1483
    %v1486 = vtanh.pop %v1485
    %v1487 = vxor.u32 %v1485, 2147483648
    %v1488 = vmul.f32 %v1487, 1.442695
    %v1489 = vpow.pop %v1488
    %v1490 = vadd.f32 %v1489, 1.0
    %v1491 = vrcp.pop %v1490
    %v1492 = vmul.f32 %v1490, %v1491
    %v1493 = vsub.f32 1.0, %v1492
    %v1494 = vmul.f32 %v1491, %v1493
    %v1495 = vadd.f32 %v1491, %v1494
    %vm1496 = vweird.f32 %v1490
    %vm1497 = vweird.f32 %v1491
    %vm1498 = vmor %vm1496, %vm1497
    %v1499 = vsel %vm1498, %v1491, %v1495
    %v1500 = vand.u32 2147483647, %v1490
    %vm1501 = vcmp.eq.f32.partialorder %v1500, 8.507059e+37
    %v1502 = vand.u32 %v1490, 2147483648
    %v1503 = vor.u32 1.1754944e-38, %v1502
    %v1504 = vsel %vm1501, %v1503, %v1499
    %v1505 = vmul.f32 1.0, %v1504
    %v1506 = vsel %vm467, %v1486, %v1505
    %v1507 = vld [vmem:[#allocation3] sm:$0xff]
    %v1508 = vmul.f32 %v1506, %v1507
    %1510 = vrot.lane.b32.xlu0 %v1506, 96
    %v1511 = vpop.permute.xlu0 %1510
    %v1513 = vmul.f32 %v1506, %v1511
    %1515 = vrot.lane.b32.xlu0 %v1513, 96
    %v1516 = vpop.permute.xlu0 %1515
    %v1518 = vadd.f32 %v1508, %v1516
    %v1519 = vtanh.pop %v1518
    %1521 = vrot.lane.b32.xlu0 %v1519, 96
    %v1522 = vpop.permute.xlu0 %1521
    %v1524 = vmul.f32 %v1506, %v1522
    %1526 = vrot.lane.b32.xlu0 %v1524, 32
    %v1527 = vpop.permute.xlu0 %1526
    %1529 = vst.msk [vmem:[#allocation2] sm:$0xff] %vm473, %v1527
    %1530 = vst.msk [vmem:[#allocation3] sm:$0xff] %vm473, %v1518
    %1531 = vst.msk [vmem:[#allocation4 + $0x68] sm:$0xff] %vm473, %v1527
    %1532 = vst.msk [vmem:[#allocation6 + $0x68] sm:$0xff] %vm473, %v1518
    %v1533 = vld [vmem:[#allocation2] sm:$0xff]
    %v1534 = vld [vmem:[%s7] sm:$0xff]
    %v1535 = vld [vmem:[%s7 + $0x8] sm:$0xff]
    %v1536 = vld [vmem:[%s7 + $0x10] sm:$0xff]
    %v1537 = vld [vmem:[%s7 + $0x18] sm:$0xff]
    %v1539 = vsel %vm473, %v1533, 0
    %1541 = vmatpush.msra.mxu0 0.0
    %1542 = vmatpush.msra.mxu0 0.0
    %1543 = vmatpush.msra.mxu0 0.0
    %1544 = vmatpush.msra.mxu0 0.0
    %1545 = vmatpush.msra.mxu0 0.0
    %1546 = vmatpush.msra.mxu0 0.0
    %1547 = vmatpush.msra.mxu0 0.0
    %1548 = vmatpush.msra.mxu0 0.0
    %1549 = vmatpush.msra.mxu0 0.0
    %1550 = vmatpush.msra.mxu0 0.0
    %1551 = vmatpush.msra.mxu0 0.0
    %1552 = vmatpush.msra.mxu0 0.0
    %1553 = vmatpush.msra.mxu0 %v1537
    %1554 = vmatpush.msra.mxu0 %v1536
    %1555 = vmatpush.msra.mxu0 %v1535
    %1556 = vmatpush.msra.mxu0 %v1534
    %1557 = vmatmul.f32.gmra.mxu0 %v1539
    %v1558 = vpop.f32.mrf.mxu0
    %v1559 = vadd.f32 0.0, %v1558
    %1560 = vdwg.mxu0
    %v1561 = vadd.f32 %v461, %v1559
    %v1562 = vtanh.pop %v1561
    %v1563 = vxor.u32 %v1561, 2147483648
    %v1564 = vmul.f32 %v1563, 1.442695
    %v1565 = vpow.pop %v1564
    %v1566 = vadd.f32 %v1565, 1.0
    %v1567 = vrcp.pop %v1566
    %v1568 = vmul.f32 %v1566, %v1567
    %v1569 = vsub.f32 1.0, %v1568
    %v1570 = vmul.f32 %v1567, %v1569
    %v1571 = vadd.f32 %v1567, %v1570
    %vm1572 = vweird.f32 %v1566
    %vm1573 = vweird.f32 %v1567
    %vm1574 = vmor %vm1572, %vm1573
    %v1575 = vsel %vm1574, %v1567, %v1571
    %v1576 = vand.u32 2147483647, %v1566
    %vm1577 = vcmp.eq.f32.partialorder %v1576, 8.507059e+37
    %v1578 = vand.u32 %v1566, 2147483648
    %v1579 = vor.u32 1.1754944e-38, %v1578
    %v1580 = vsel %vm1577, %v1579, %v1575
    %v1581 = vmul.f32 1.0, %v1580
    %v1582 = vsel %vm467, %v1562, %v1581
    %v1583 = vld [vmem:[#allocation3] sm:$0xff]
    %v1584 = vmul.f32 %v1582, %v1583
    %1586 = vrot.lane.b32.xlu0 %v1582, 96
    %v1587 = vpop.permute.xlu0 %1586
    %v1589 = vmul.f32 %v1582, %v1587
    %1591 = vrot.lane.b32.xlu0 %v1589, 96
    %v1592 = vpop.permute.xlu0 %1591
    %v1594 = vadd.f32 %v1584, %v1592
    %v1595 = vtanh.pop %v1594
    %1597 = vrot.lane.b32.xlu0 %v1595, 96
    %v1598 = vpop.permute.xlu0 %1597
    %v1600 = vmul.f32 %v1582, %v1598
    %1602 = vrot.lane.b32.xlu0 %v1600, 32
    %v1603 = vpop.permute.xlu0 %1602
    %1605 = vst.msk [vmem:[#allocation2] sm:$0xff] %vm473, %v1603
    %1606 = vst.msk [vmem:[#allocation3] sm:$0xff] %vm473, %v1594
    %1607 = vst.msk [vmem:[#allocation4 + $0x70] sm:$0xff] %vm473, %v1603
    %1608 = vst.msk [vmem:[#allocation6 + $0x70] sm:$0xff] %vm473, %v1594
    %v1609 = vld [vmem:[#allocation2] sm:$0xff]
    %v1610 = vld [vmem:[%s7] sm:$0xff]
    %v1611 = vld [vmem:[%s7 + $0x8] sm:$0xff]
    %v1612 = vld [vmem:[%s7 + $0x10] sm:$0xff]
    %v1613 = vld [vmem:[%s7 + $0x18] sm:$0xff]
    %v1615 = vsel %vm473, %v1609, 0
    %1617 = vmatpush.msra.mxu0 0.0
    %1618 = vmatpush.msra.mxu0 0.0
    %1619 = vmatpush.msra.mxu0 0.0
    %1620 = vmatpush.msra.mxu0 0.0
    %1621 = vmatpush.msra.mxu0 0.0
    %1622 = vmatpush.msra.mxu0 0.0
    %1623 = vmatpush.msra.mxu0 0.0
    %1624 = vmatpush.msra.mxu0 0.0
    %1625 = vmatpush.msra.mxu0 0.0
    %1626 = vmatpush.msra.mxu0 0.0
    %1627 = vmatpush.msra.mxu0 0.0
    %1628 = vmatpush.msra.mxu0 0.0
    %1629 = vmatpush.msra.mxu0 %v1613
    %1630 = vmatpush.msra.mxu0 %v1612
    %1631 = vmatpush.msra.mxu0 %v1611
    %1632 = vmatpush.msra.mxu0 %v1610
    %1633 = vmatmul.f32.gmra.mxu0 %v1615
    %v1634 = vpop.f32.mrf.mxu0
    %v1635 = vadd.f32 0.0, %v1634
    %1636 = vdwg.mxu0
    %v1637 = vadd.f32 %v462, %v1635
    %v1638 = vtanh.pop %v1637
    %v1639 = vxor.u32 %v1637, 2147483648
    %v1640 = vmul.f32 %v1639, 1.442695
    %v1641 = vpow.pop %v1640
    %v1642 = vadd.f32 %v1641, 1.0
    %v1643 = vrcp.pop %v1642
    %v1644 = vmul.f32 %v1642, %v1643
    %v1645 = vsub.f32 1.0, %v1644
    %v1646 = vmul.f32 %v1643, %v1645
    %v1647 = vadd.f32 %v1643, %v1646
    %vm1648 = vweird.f32 %v1642
    %vm1649 = vweird.f32 %v1643
    %vm1650 = vmor %vm1648, %vm1649
    %v1651 = vsel %vm1650, %v1643, %v1647
    %v1652 = vand.u32 2147483647, %v1642
    %vm1653 = vcmp.eq.f32.partialorder %v1652, 8.507059e+37
    %v1654 = vand.u32 %v1642, 2147483648
    %v1655 = vor.u32 1.1754944e-38, %v1654
    %v1656 = vsel %vm1653, %v1655, %v1651
    %v1657 = vmul.f32 1.0, %v1656
    %v1658 = vsel %vm467, %v1638, %v1657
    %v1659 = vld [vmem:[#allocation3] sm:$0xff]
    %v1660 = vmul.f32 %v1658, %v1659
    %1662 = vrot.lane.b32.xlu0 %v1658, 96
    %v1663 = vpop.permute.xlu0 %1662
    %v1665 = vmul.f32 %v1658, %v1663
    %1667 = vrot.lane.b32.xlu0 %v1665, 96
    %v1668 = vpop.permute.xlu0 %1667
    %v1670 = vadd.f32 %v1660, %v1668
    %v1671 = vtanh.pop %v1670
    %1673 = vrot.lane.b32.xlu0 %v1671, 96
    %v1674 = vpop.permute.xlu0 %1673
    %v1676 = vmul.f32 %v1658, %v1674
    %1678 = vrot.lane.b32.xlu0 %v1676, 32
    %v1679 = vpop.permute.xlu0 %1678
    %1681 = vst.msk [vmem:[#allocation2] sm:$0xff] %vm473, %v1679
    %1682 = vst.msk [vmem:[#allocation3] sm:$0xff] %vm473, %v1670
    %1683 = vst.msk [vmem:[#allocation4 + $0x78] sm:$0xff] %vm473, %v1679
    %1684 = vst.msk [vmem:[#allocation6 + $0x78] sm:$0xff] %vm473, %v1670
    // Predicated region
    $region46: #{adaptive_lstm_sequence.1} parent=1 // pred_check
      _
    $region47: #{adaptive_lstm_sequence.1} parent=1 // pred_check_branch
      %1686 = sbr.rel (0) target = $region49
    $region48: #{adaptive_lstm_sequence.1} parent=1 // pred_region
      %1688 = vsyncadd [#allocation5], 0
      %s1689 = sshll.u32 [#allocation4], 4
      %s1690 = int_to_ptr.vmem [resolvable:$true] %s1689
      %s1691 = sshll.u32 %s10, 4
      %s1692 = int_to_ptr.hbm [resolvable:$true] %s1691
      %1697 = dma.vmem_to_hbm [thread:$0]  %s1690, 2048, %s1692, [#allocation5], 128, 128, 8
    $region49: #{adaptive_lstm_sequence.1} parent=1 // pred_fallthru
      _
    // Predicated region
    $region50: #{adaptive_lstm_sequence.1} parent=1 // pred_check
      _
    $region51: #{adaptive_lstm_sequence.1} parent=1 // pred_check_branch
      %1699 = sbr.rel (0) target = $region53
    $region52: #{adaptive_lstm_sequence.1} parent=1 // pred_region
      %1701 = vsyncadd [#allocation7], 0
      %s1702 = sshll.u32 [#allocation6], 4
      %s1703 = int_to_ptr.vmem [resolvable:$true] %s1702
      %s1704 = sshll.u32 %s11, 4
      %s1705 = int_to_ptr.hbm [resolvable:$true] %s1704
      %1710 = dma.vmem_to_hbm [thread:$0]  %s1703, 2048, %s1705, [#allocation7], 128, 128, 8
    $region53: #{adaptive_lstm_sequence.1} parent=1 // pred_fallthru
      _
    // Predicated region
    $region54: #{adaptive_lstm_sequence.1} parent=1 // pred_check
      _
    $region55: #{adaptive_lstm_sequence.1} parent=1 // pred_check_branch
      %1712 = sbr.rel (0) target = $region57
    $region56: #{adaptive_lstm_sequence.1} parent=1 // pred_region
      %1714 = dma.done [#allocation5], 2048
    $region57: #{adaptive_lstm_sequence.1} parent=1 // pred_fallthru
      _
    // Predicated region
    $region58: #{adaptive_lstm_sequence.1} parent=1 // pred_check
      _
    $region59: #{adaptive_lstm_sequence.1} parent=1 // pred_check_branch
      %1716 = sbr.rel (0) target = $region61
    $region60: #{adaptive_lstm_sequence.1} parent=1 // pred_region
      %1718 = dma.done [#allocation7], 2048
    $region61: #{adaptive_lstm_sequence.1} parent=1 // pred_fallthru
      _
    %1719 = vsyncpa [#allocation5], 1
    %1720 = vsyncpa [#allocation7], 1

</llo_original>
